<compile_context>
chip_gen: v5e
topology: v5e:2x2
jax: 0.10.0
libtpu: 0.0.40
codegen_flags: <defaults>
</compile_context>

<pallas_src>
import functools
import math

import numpy as np
import jax
import jax.numpy as jnp
from jax import lax
from jax.experimental import pallas as pl
from jax.experimental.pallas import tpu as pltpu

LN_EPS = 1e-5  # nn.LayerNorm default


def _layer_norm(x, gamma, beta):
    # One-pass form: mean and mean-of-squares reduces are independent (overlap
    # on the XLUs); var clamped at 0 against f32 cancellation.
    mu = jnp.mean(x, axis=-1, keepdims=True)
    ms = jnp.mean(x * x, axis=-1, keepdims=True)
    var = jnp.maximum(ms - mu * mu, 0.0)
    return (x - mu) * lax.rsqrt(var + LN_EPS) * gamma + beta


# ---------------------------------------------------------------------------
# Fused per-block kernel (Bt batch items per grid step):
#   per head: rank-1 positional+QKV fold -> scores -> diagonal softmax weight
#   -> diag * V accumulated; then fc, residual+LN, MLP (Linear-LN-ReLU x2,
#   Linear), residual+LN — all tail matmuls/LNs on the flattened (Bt*S_pad, E).
# ---------------------------------------------------------------------------
def _encoder_fused_kernel(patch_ref, cwqkv_ref, bqkv_ref, bp_last_ref,
                          wfc_ref, vec_e_ref,
                          w1_ref, vec_f1_ref,
                          w2_ref, vec_f2_ref,
                          w3_ref,
                          out_ref, *, n_heads, emb, bt, s_pad, s_real):
    E = emb
    ve = vec_e_ref[...]                                   # (6, E): n1_g n1_b c3 n2_g n2_b cw_last
    vf1 = vec_f1_ref[...]                                 # (3, F1): c1 l1_g l1_b
    vf2 = vec_f2_ref[...]                                 # (3, F2): c2 l2_g l2_b

    # Hoisted lane-broadcast of the patch column; reused by every head + skip.
    pat = patch_ref[...]                                  # (Bt, S_pad, 1)
    patb = jnp.broadcast_to(pat, (bt, s_pad, 3 * E))      # (Bt, S_pad, 3E)

    # Diagonal selector + padded-key mask, shared across heads.
    row = lax.broadcasted_iota(jnp.int32, (s_pad, s_pad), 0)
    col = lax.broadcasted_iota(jnp.int32, (s_pad, s_pad), 1)
    eye = (row == col).astype(jnp.float32)
    key_valid = col < s_real

    acc = jnp.zeros((bt, s_pad, E), jnp.float32)
    skip = None
    for h in range(n_heads):                              # tiny head count; unrolled
        # Rank-1 fold: enc @ [Wq|Wk|Wv] == patches * (conv_w @ W) + bias_pos @ W.
        # (1/sqrt(E) already folded into the Q columns in the wrapper.)
        qkv = patb * cwqkv_ref[h:h + 1, :] + bqkv_ref[h]  # (Bt, S_pad, 3E), VPU only
        q = qkv[..., :E]
        k = qkv[..., E:2 * E]
        v = qkv[..., 2 * E:]

        # Only the softmax diagonal is needed: row-max / row-sum, never the full
        # softmax matrix.  Diagonal pulled from scores via the iota mask.
        scores = jnp.einsum("bse,bte->bst", q, k,
                            preferred_element_type=jnp.float32)   # (Bt, S_pad, S_pad)
        s_diag = jnp.sum(scores * eye, axis=-1, keepdims=True)    # scores[b, u, u]
        scores = jnp.where(key_valid, scores, -1e30)              # mask padded keys
        m = jnp.max(scores, axis=-1, keepdims=True)
        denom = jnp.sum(jnp.exp(scores - m), axis=-1, keepdims=True)
        acc = acc + (jnp.exp(s_diag - m) / denom) * v             # 'tuu,tuv->tuv'

        if h == n_heads - 1:                              # torch keeps last head's enc
            skip = patb[..., :E] * ve[5:6] + bp_last_ref[...]     # (Bt, S_pad, E)

    # Flatten batch into the (8-aligned) sublane dim for the shared matmuls/LNs.
    acc2 = acc.reshape(bt * s_pad, E)
    skip2 = skip.reshape(bt * s_pad, E)

    # 1/n_heads head-mean is folded into wfc in the wrapper.
    mha = jnp.dot(acc2.astype(jnp.bfloat16), wfc_ref[...],
                  preferred_element_type=jnp.float32)
    a = _layer_norm(skip2 + mha, ve[0:1], ve[1:2])

    h1 = jnp.dot(a.astype(jnp.bfloat16), w1_ref[...],
                 preferred_element_type=jnp.float32) + vf1[0:1]
    h1 = jnp.maximum(_layer_norm(h1, vf1[1:2], vf1[2:3]), 0.0)

    h2 = jnp.dot(h1.astype(jnp.bfloat16), w2_ref[...],
                 preferred_element_type=jnp.float32) + vf2[0:1]
    h2 = jnp.maximum(_layer_norm(h2, vf2[1:2], vf2[2:3]), 0.0)

    ff = jnp.dot(h2.astype(jnp.bfloat16), w3_ref[...],
                 preferred_element_type=jnp.float32) + ve[2:3]
    out_ref[...] = _layer_norm(a + ff, ve[3:4], ve[4:5]).reshape(bt, s_pad, E)


# ---------------------------------------------------------------------------
# PositionalEncoding (first_block=True), pure-JAX form used by the reference.
# A 1x1 conv with a single input channel is an outer product of the flattened
# image with the (E,) filter.
# ---------------------------------------------------------------------------
def positional_encoding(x, conv_w, conv_b, cls_token, pos_embed):
    B = x.shape[0]
    E = conv_w.shape[-1]
    patches = x.reshape(B, -1)                            # (B, H*W); in_channels = 1
    enc = patches[:, :, None] * conv_w[None, None, :] + conv_b[None, None, :]
    cls = jnp.broadcast_to(cls_token, (B, 1, E))
    return jnp.concatenate([cls, enc], axis=1) + pos_embed[None]   # (B, S, E)


def transformer_encoder(x, p):
    B = x.shape[0]
    n_heads, E, _ = p["wq_t"].shape
    F1 = p["w1_t"].shape[-1]
    F2 = p["w2_t"].shape[-1]
    HW = x.shape[-2] * x.shape[-1]
    S = 1 + HW
    S_pad = -(-S // 8) * 8                                # sublane-aligned sequence

    # Batch tiling: Bt rows per grid step, grid kept >= 2 (v7x: both TCs busy;
    # v5e/v6e: fewer ~600-cycle grid steps).
    Bt = max(1, -(-B // 2))
    G = -(-B // Bt)
    Bp = G * Bt

    inv_norm = 1.0 / math.sqrt(E)

    # Patches: zero cls slot + flattened image, padded to (Bp, S_pad, 1).
    patches = jnp.pad(x.reshape(B, HW), ((0, Bp - B), (1, S_pad - S)))[..., None]

    # Fold conv bias + pos_embed (+ cls token on row 0) into one additive term.
    bias_pos = p["pos_embed"] + p["conv_b"][:, None, :]                 # (H, S, E)
    bias_pos = bias_pos.at[:, 0, :].add(p["cls_token"][:, 0, :] - p["conv_b"])

    # Rank-1 fold of the positional encoding into the QKV weights:
    #   enc @ [Wq|Wk|Wv] = patches * (conv_w @ Wqkv) + bias_pos @ Wqkv
    wqkv = jnp.concatenate([p["wq_t"], p["wk_t"], p["wv_t"]], axis=-1)  # (H, E, 3E)
    cwqkv = jnp.einsum("he,hef->hf", p["conv_w"], wqkv)                 # (H, 3E)
    bqkv = jnp.einsum("hse,hef->hsf", bias_pos, wqkv)                   # (H, S, 3E)
    scale = jnp.concatenate([jnp.full((E,), inv_norm, jnp.float32),
                             jnp.ones((2 * E,), jnp.float32)])          # 1/sqrt(E) on Q
    cwqkv = cwqkv * scale
    bqkv = jnp.pad(bqkv * scale, ((0, 0), (0, S_pad - S), (0, 0)))      # zero pad rows
    bp_last = jnp.pad(bias_pos[-1], ((0, S_pad - S), (0, 0)))           # (S_pad, E)

    # 1/n_heads head-mean folded into fc; MXU weights in bf16 (halved DMA bytes).
    wfc = (p["wfc_t"] / n_heads).astype(jnp.bfloat16)
    w1 = p["w1_t"].astype(jnp.bfloat16)
    w2 = p["w2_t"].astype(jnp.bfloat16)
    w3 = p["w3_t"].astype(jnp.bfloat16)

    # Pack the small per-stage vectors (fewer tiny DMA streams).
    vec_e = jnp.concatenate([p["n1_g"], p["n1_b"], p["c3"],
                             p["n2_g"], p["n2_b"], p["conv_w"][-1:]], axis=0)  # (6, E)
    vec_f1 = jnp.concatenate([p["c1"], p["l1_g"], p["l1_b"]], axis=0)   # (3, F1)
    vec_f2 = jnp.concatenate([p["c2"], p["l2_g"], p["l2_b"]], axis=0)   # (3, F2)

    def const_spec(shape):
        n = len(shape)
        return pl.BlockSpec(shape, lambda g, _n=n: (0,) * _n)           # loaded once

    out = pl.pallas_call(
        functools.partial(_encoder_fused_kernel, n_heads=n_heads, emb=E,
                          bt=Bt, s_pad=S_pad, s_real=S),
        out_shape=jax.ShapeDtypeStruct((Bp, S_pad, E), jnp.float32),
        grid_spec=pltpu.PrefetchScalarGridSpec(
            num_scalar_prefetch=0,
            grid=(G,),
            in_specs=[
                pl.BlockSpec((Bt, S_pad, 1), lambda g: (g, 0, 0)),   # patches
                const_spec((n_heads, 3 * E)),                        # conv_w @ Wqkv
                const_spec((n_heads, S_pad, 3 * E)),                 # bias_pos @ Wqkv
                const_spec((S_pad, E)),                              # bias_pos[last] (skip)
                const_spec((E, E)),                                  # fc weight (bf16)
                const_spec((6, E)),                                  # packed E vectors
                const_spec((E, F1)),                                 # ff linear 1 (bf16)
                const_spec((3, F1)),                                 # packed F1 vectors
                const_spec((F1, F2)),                                # ff linear 2 (bf16)
                const_spec((3, F2)),                                 # packed F2 vectors
                const_spec((F2, E)),                                 # ff linear 3 (bf16)
            ],
            out_specs=pl.BlockSpec((Bt, S_pad, E), lambda g: (g, 0, 0)),
        ),
        compiler_params=pltpu.CompilerParams(
            dimension_semantics=("parallel",)),                      # batch shards TCs (v7x)
    )(patches, cwqkv, bqkv, bp_last,
      wfc, vec_e, w1, vec_f1, w2, vec_f2, w3)
    return out[:B, :S, :]


# ---------------------------------------------------------------------------
# Deterministic parameter init (shapes from the module's __init__).
# cls_token / pos_embed use small random values instead of torch's zeros so the
# positional path is exercised; LayerNorms use torch defaults (1, 0).
# ---------------------------------------------------------------------------
def init_params(key, E, n_heads, F1, F2, S):
    ks = jax.random.split(key, 16)

    def nrm(k, shape, scale=0.1):
        return scale * jax.random.normal(k, shape, jnp.float32)

    return dict(
        conv_w=nrm(ks[0], (n_heads, E)),        # Conv2d(1, E, 1) weight, squeezed
        conv_b=nrm(ks[1], (n_heads, E)),
        cls_token=nrm(ks[2], (n_heads, 1, E)),
        pos_embed=nrm(ks[3], (n_heads, S, E)),
        wq_t=nrm(ks[4], (n_heads, E, E)),
        wk_t=nrm(ks[5], (n_heads, E, E)),
        wv_t=nrm(ks[6], (n_heads, E, E)),
        wfc_t=nrm(ks[7], (E, E)),
        n1_g=jnp.ones((1, E), jnp.float32), n1_b=jnp.zeros((1, E), jnp.float32),
        w1_t=nrm(ks[8], (E, F1)), c1=nrm(ks[9], (1, F1)),
        l1_g=jnp.ones((1, F1), jnp.float32), l1_b=jnp.zeros((1, F1), jnp.float32),
        w2_t=nrm(ks[10], (F1, F2)), c2=nrm(ks[11], (1, F2)),
        l2_g=jnp.ones((1, F2), jnp.float32), l2_b=jnp.zeros((1, F2), jnp.float32),
        w3_t=nrm(ks[12], (F2, E)), c3=nrm(ks[13], (1, E)),
        n2_g=jnp.ones((1, E), jnp.float32), n2_b=jnp.zeros((1, E), jnp.float32),
    )


# Pure-JAX reference mirroring the PyTorch forward exactly (f32 end to end).
def reference(x, p):
    n_heads, _, E = p["wq_t"].shape
    vals = []
    for h in range(n_heads):
        enc = positional_encoding(x, p["conv_w"][h], p["conv_b"][h],
                                  p["cls_token"][h], p["pos_embed"][h])
        q = enc @ p["wq_t"][h]
        k = enc @ p["wk_t"][h]
        v = enc @ p["wv_t"][h]
        sc = jnp.einsum("buv,bwv->buw", q, k) / math.sqrt(E)
        sm = jax.nn.softmax(sc, axis=-1)
        diag = jnp.einsum("buu->bu", sm)                  # torch 'tuu,tuv->tuv'
        vals.append(diag[..., None] * v)
        skip = enc
    mha = jnp.mean(jnp.stack(vals), axis=0) @ p["wfc_t"]

    def ln(t, g, b):
        mu = t.mean(-1, keepdims=True)
        var = ((t - mu) ** 2).mean(-1, keepdims=True)
        return (t - mu) / jnp.sqrt(var + LN_EPS) * g + b

    a = ln(skip + mha, p["n1_g"], p["n1_b"])
    h1 = jnp.maximum(ln(a @ p["w1_t"] + p["c1"], p["l1_g"], p["l1_b"]), 0.0)
    h2 = jnp.maximum(ln(h1 @ p["w2_t"] + p["c2"], p["l2_g"], p["l2_b"]), 0.0)
    ff = h2 @ p["w3_t"] + p["c3"]
    return ln(a + ff, p["n2_g"], p["n2_b"])


if __name__ == "__main__":
    key = jax.random.PRNGKey(0)
    k_x, k_p = jax.random.split(key)

    B, H, W = 4, 4, 4                                    # B=4 -> Bt=2, grid=2
    E, n_heads, F1, F2 = 32, 2, 64, 48
    S = 1 + H * W                                        # 17 (cls + patches)

    x = jax.random.normal(k_x, (B, 1, H, W), jnp.float32)
    params = init_params(k_p, E, n_heads, F1, F2, S)

    out = jax.jit(transformer_encoder)(x, params)
    jax.block_until_ready(out)

    ref = reference(x, params)
    assert out.shape == (B, S, E)
    np.testing.assert_allclose(np.asarray(out), np.asarray(ref),
                               atol=5e-2, rtol=5e-2)
    print("KERNEL_OK")
</pallas_src>

<mosaic_0001>
module attributes {stable_mosaic.version = 11 : i64} {
  func.func @_encoder_fused_kernel(%arg0: i32, %arg1: memref<2x24x1xf32, #tpu.memory_space<vmem>>, %arg2: memref<2x96xf32, #tpu.memory_space<vmem>>, %arg3: memref<2x24x96xf32, #tpu.memory_space<vmem>>, %arg4: memref<24x32xf32, #tpu.memory_space<vmem>>, %arg5: memref<32x32xbf16, #tpu.memory_space<vmem>>, %arg6: memref<6x32xf32, #tpu.memory_space<vmem>>, %arg7: memref<32x64xbf16, #tpu.memory_space<vmem>>, %arg8: memref<3x64xf32, #tpu.memory_space<vmem>>, %arg9: memref<64x48xbf16, #tpu.memory_space<vmem>>, %arg10: memref<3x48xf32, #tpu.memory_space<vmem>>, %arg11: memref<48x32xbf16, #tpu.memory_space<vmem>>, %arg12: memref<2x24x32xf32, #tpu.memory_space<vmem>>) attributes {dimension_semantics = [#tpu.dimension_semantics<parallel>], iteration_bounds = array<i64: 2>, scalar_prefetch = 0 : i64, scratch_operands = 0 : i64, tpu.core_type = #tpu.core_type<tc>, window_params = [{transform_indices = @transform_0, window_bounds = array<i64: 2, 24, 1>}, {pipeline_mode = #tpu.pipeline_mode<synchronous>, transform_indices = @transform_1, window_bounds = array<i64: 2, 96>}, {pipeline_mode = #tpu.pipeline_mode<synchronous>, transform_indices = @transform_2, window_bounds = array<i64: 2, 24, 96>}, {pipeline_mode = #tpu.pipeline_mode<synchronous>, transform_indices = @transform_3, window_bounds = array<i64: 24, 32>}, {pipeline_mode = #tpu.pipeline_mode<synchronous>, transform_indices = @transform_4, window_bounds = array<i64: 32, 32>}, {pipeline_mode = #tpu.pipeline_mode<synchronous>, transform_indices = @transform_5, window_bounds = array<i64: 6, 32>}, {pipeline_mode = #tpu.pipeline_mode<synchronous>, transform_indices = @transform_6, window_bounds = array<i64: 32, 64>}, {pipeline_mode = #tpu.pipeline_mode<synchronous>, transform_indices = @transform_7, window_bounds = array<i64: 3, 64>}, {pipeline_mode = #tpu.pipeline_mode<synchronous>, transform_indices = @transform_8, window_bounds = array<i64: 64, 48>}, {pipeline_mode = #tpu.pipeline_mode<synchronous>, transform_indices = @transform_9, window_bounds = array<i64: 3, 48>}, {pipeline_mode = #tpu.pipeline_mode<synchronous>, transform_indices = @transform_10, window_bounds = array<i64: 48, 32>}, {transform_indices = @transform_11, window_bounds = array<i64: 2, 24, 32>}]} {
    %c0 = arith.constant 0 : index
    %c0_0 = arith.constant 0 : index
    %0 = vector.load %arg6[%c0, %c0_0] : memref<6x32xf32, #tpu.memory_space<vmem>>, vector<6x32xf32>
    %c0_1 = arith.constant 0 : index
    %c0_2 = arith.constant 0 : index
    %1 = vector.load %arg8[%c0_1, %c0_2] : memref<3x64xf32, #tpu.memory_space<vmem>>, vector<3x64xf32>
    %c0_3 = arith.constant 0 : index
    %c0_4 = arith.constant 0 : index
    %2 = vector.load %arg10[%c0_3, %c0_4] : memref<3x48xf32, #tpu.memory_space<vmem>>, vector<3x48xf32>
    %c0_5 = arith.constant 0 : index
    %c0_6 = arith.constant 0 : index
    %c0_7 = arith.constant 0 : index
    %3 = vector.load %arg1[%c0_5, %c0_6, %c0_7] : memref<2x24x1xf32, #tpu.memory_space<vmem>>, vector<2x24x1xf32>
    %4 = vector.shape_cast %3 : vector<2x24x1xf32> to vector<2x24x1xf32>
    %5 = vector.broadcast %4 : vector<2x24x1xf32> to vector<2x24x96xf32>
    %6 = tpu.iota {dimensions = array<i32: 0>} : vector<24x24xi32>
    %7 = tpu.iota {dimensions = array<i32: 1>} : vector<24x24xi32>
    %8 = arith.cmpi eq, %6, %7 : vector<24x24xi32>
    %9 = arith.extui %8 : vector<24x24xi1> to vector<24x24xi32>
    %10 = arith.sitofp %9 : vector<24x24xi32> to vector<24x24xf32>
    %c17_i32 = arith.constant 17 : i32
    %11 = vector.broadcast %c17_i32 : i32 to vector<24x24xi32>
    %12 = arith.cmpi slt, %7, %11 : vector<24x24xi32>
    %cst = arith.constant 0.000000e+00 : f32
    %13 = vector.broadcast %cst : f32 to vector<2x24x32xf32>
    %c0_8 = arith.constant 0 : index
    %c0_9 = arith.constant 0 : index
    %14 = vector.load %arg2[%c0_8, %c0_9] : memref<2x96xf32, #tpu.memory_space<vmem>>, vector<1x96xf32>
    %15 = vector.shape_cast %14 : vector<1x96xf32> to vector<1x1x96xf32>
    %16 = vector.broadcast %15 : vector<1x1x96xf32> to vector<2x24x96xf32>
    %17 = arith.mulf %5, %16 : vector<2x24x96xf32>
    %c0_10 = arith.constant 0 : index
    %c0_11 = arith.constant 0 : index
    %c0_12 = arith.constant 0 : index
    %18 = vector.load %arg3[%c0_10, %c0_11, %c0_12] : memref<2x24x96xf32, #tpu.memory_space<vmem>>, vector<1x24x96xf32>
    %19 = vector.shape_cast %18 : vector<1x24x96xf32> to vector<24x96xf32>
    %20 = vector.shape_cast %19 : vector<24x96xf32> to vector<1x24x96xf32>
    %21 = vector.broadcast %20 : vector<1x24x96xf32> to vector<2x24x96xf32>
    %22 = arith.addf %17, %21 : vector<2x24x96xf32>
    %23 = vector.extract_strided_slice %22 {offsets = [0, 0, 0], sizes = [2, 24, 32], strides = [1, 1, 1]} : vector<2x24x96xf32> to vector<2x24x32xf32>
    %24 = vector.extract_strided_slice %22 {offsets = [0, 0, 32], sizes = [2, 24, 32], strides = [1, 1, 1]} : vector<2x24x96xf32> to vector<2x24x32xf32>
    %25 = vector.extract_strided_slice %22 {offsets = [0, 0, 64], sizes = [2, 24, 32], strides = [1, 1, 1]} : vector<2x24x96xf32> to vector<2x24x32xf32>
    "tpu.trace_start"() <{level = 10 : i32, message = "bse,bte->bst"}> : () -> ()
    %cst_13 = arith.constant dense<0.000000e+00> : vector<2x24x24xf32>
    %26 = tpu.matmul %23, %24, %cst_13 {dimension_numbers = #tpu.dot_dimension_numbers<[2], [2], [1], [1], [0, 0, 0, 1, 1, 1], [0], [0]>} : vector<2x24x32xf32>, vector<2x24x32xf32>, vector<2x24x24xf32> -> vector<2x24x24xf32>
    "tpu.trace_stop"() : () -> ()
    %27 = vector.shape_cast %10 : vector<24x24xf32> to vector<1x24x24xf32>
    %28 = vector.broadcast %27 : vector<1x24x24xf32> to vector<2x24x24xf32>
    %29 = arith.mulf %26, %28 : vector<2x24x24xf32>
    %cst_14 = arith.constant dense<0.000000e+00> : vector<2x24xf32>
    %30 = vector.multi_reduction <add>, %29, %cst_14 [2] : vector<2x24x24xf32> to vector<2x24xf32>
    %31 = vector.shape_cast %30 : vector<2x24xf32> to vector<2x24x1xf32>
    %cst_15 = arith.constant -1.000000e+30 : f32
    %32 = vector.shape_cast %12 : vector<24x24xi1> to vector<1x24x24xi1>
    %33 = vector.broadcast %32 : vector<1x24x24xi1> to vector<2x24x24xi1>
    %34 = vector.broadcast %cst_15 : f32 to vector<2x24x24xf32>
    %35 = arith.select %33, %26, %34 : vector<2x24x24xi1>, vector<2x24x24xf32>
    %cst_16 = arith.constant dense<0xFF800000> : vector<2x24xf32>
    %36 = vector.multi_reduction <maximumf>, %35, %cst_16 [2] : vector<2x24x24xf32> to vector<2x24xf32>
    %37 = vector.shape_cast %36 : vector<2x24xf32> to vector<2x24x1xf32>
    %38 = vector.broadcast %37 : vector<2x24x1xf32> to vector<2x24x24xf32>
    %39 = arith.subf %35, %38 : vector<2x24x24xf32>
    %40 = math.exp %39 : vector<2x24x24xf32>
    %cst_17 = arith.constant dense<0.000000e+00> : vector<2x24xf32>
    %41 = vector.multi_reduction <add>, %40, %cst_17 [2] : vector<2x24x24xf32> to vector<2x24xf32>
    %42 = vector.shape_cast %41 : vector<2x24xf32> to vector<2x24x1xf32>
    %43 = arith.subf %31, %37 : vector<2x24x1xf32>
    %44 = math.exp %43 : vector<2x24x1xf32>
    %45 = arith.divf %44, %42 : vector<2x24x1xf32>
    %46 = vector.broadcast %45 : vector<2x24x1xf32> to vector<2x24x32xf32>
    %47 = arith.mulf %46, %25 : vector<2x24x32xf32>
    %48 = arith.addf %13, %47 : vector<2x24x32xf32>
    %c1 = arith.constant 1 : index
    %c0_18 = arith.constant 0 : index
    %49 = vector.load %arg2[%c1, %c0_18] : memref<2x96xf32, #tpu.memory_space<vmem>>, vector<1x96xf32>
    %50 = vector.shape_cast %49 : vector<1x96xf32> to vector<1x1x96xf32>
    %51 = vector.broadcast %50 : vector<1x1x96xf32> to vector<2x24x96xf32>
    %52 = arith.mulf %5, %51 : vector<2x24x96xf32>
    %c1_19 = arith.constant 1 : index
    %c0_20 = arith.constant 0 : index
    %c0_21 = arith.constant 0 : index
    %53 = vector.load %arg3[%c1_19, %c0_20, %c0_21] : memref<2x24x96xf32, #tpu.memory_space<vmem>>, vector<1x24x96xf32>
    %54 = vector.shape_cast %53 : vector<1x24x96xf32> to vector<24x96xf32>
    %55 = vector.shape_cast %54 : vector<24x96xf32> to vector<1x24x96xf32>
    %56 = vector.broadcast %55 : vector<1x24x96xf32> to vector<2x24x96xf32>
    %57 = arith.addf %52, %56 : vector<2x24x96xf32>
    %58 = vector.extract_strided_slice %57 {offsets = [0, 0, 0], sizes = [2, 24, 32], strides = [1, 1, 1]} : vector<2x24x96xf32> to vector<2x24x32xf32>
    %59 = vector.extract_strided_slice %57 {offsets = [0, 0, 32], sizes = [2, 24, 32], strides = [1, 1, 1]} : vector<2x24x96xf32> to vector<2x24x32xf32>
    %60 = vector.extract_strided_slice %57 {offsets = [0, 0, 64], sizes = [2, 24, 32], strides = [1, 1, 1]} : vector<2x24x96xf32> to vector<2x24x32xf32>
    "tpu.trace_start"() <{level = 10 : i32, message = "bse,bte->bst"}> : () -> ()
    %cst_22 = arith.constant dense<0.000000e+00> : vector<2x24x24xf32>
    %61 = tpu.matmul %58, %59, %cst_22 {dimension_numbers = #tpu.dot_dimension_numbers<[2], [2], [1], [1], [0, 0, 0, 1, 1, 1], [0], [0]>} : vector<2x24x32xf32>, vector<2x24x32xf32>, vector<2x24x24xf32> -> vector<2x24x24xf32>
    "tpu.trace_stop"() : () -> ()
    %62 = vector.shape_cast %10 : vector<24x24xf32> to vector<1x24x24xf32>
    %63 = vector.broadcast %62 : vector<1x24x24xf32> to vector<2x24x24xf32>
    %64 = arith.mulf %61, %63 : vector<2x24x24xf32>
    %cst_23 = arith.constant dense<0.000000e+00> : vector<2x24xf32>
    %65 = vector.multi_reduction <add>, %64, %cst_23 [2] : vector<2x24x24xf32> to vector<2x24xf32>
    %66 = vector.shape_cast %65 : vector<2x24xf32> to vector<2x24x1xf32>
    %cst_24 = arith.constant -1.000000e+30 : f32
    %67 = vector.shape_cast %12 : vector<24x24xi1> to vector<1x24x24xi1>
    %68 = vector.broadcast %67 : vector<1x24x24xi1> to vector<2x24x24xi1>
    %69 = vector.broadcast %cst_24 : f32 to vector<2x24x24xf32>
    %70 = arith.select %68, %61, %69 : vector<2x24x24xi1>, vector<2x24x24xf32>
    %cst_25 = arith.constant dense<0xFF800000> : vector<2x24xf32>
    %71 = vector.multi_reduction <maximumf>, %70, %cst_25 [2] : vector<2x24x24xf32> to vector<2x24xf32>
    %72 = vector.shape_cast %71 : vector<2x24xf32> to vector<2x24x1xf32>
    %73 = vector.broadcast %72 : vector<2x24x1xf32> to vector<2x24x24xf32>
    %74 = arith.subf %70, %73 : vector<2x24x24xf32>
    %75 = math.exp %74 : vector<2x24x24xf32>
    %cst_26 = arith.constant dense<0.000000e+00> : vector<2x24xf32>
    %76 = vector.multi_reduction <add>, %75, %cst_26 [2] : vector<2x24x24xf32> to vector<2x24xf32>
    %77 = vector.shape_cast %76 : vector<2x24xf32> to vector<2x24x1xf32>
    %78 = arith.subf %66, %72 : vector<2x24x1xf32>
    %79 = math.exp %78 : vector<2x24x1xf32>
    %80 = arith.divf %79, %77 : vector<2x24x1xf32>
    %81 = vector.broadcast %80 : vector<2x24x1xf32> to vector<2x24x32xf32>
    %82 = arith.mulf %81, %60 : vector<2x24x32xf32>
    %83 = arith.addf %48, %82 : vector<2x24x32xf32>
    %84 = vector.extract_strided_slice %5 {offsets = [0, 0, 0], sizes = [2, 24, 32], strides = [1, 1, 1]} : vector<2x24x96xf32> to vector<2x24x32xf32>
    %85 = vector.extract_strided_slice %0 {offsets = [5, 0], sizes = [1, 32], strides = [1, 1]} : vector<6x32xf32> to vector<1x32xf32>
    %86 = vector.shape_cast %85 : vector<1x32xf32> to vector<1x1x32xf32>
    %87 = vector.broadcast %86 : vector<1x1x32xf32> to vector<2x24x32xf32>
    %88 = arith.mulf %84, %87 : vector<2x24x32xf32>
    %c0_27 = arith.constant 0 : index
    %c0_28 = arith.constant 0 : index
    %89 = vector.load %arg4[%c0_27, %c0_28] : memref<24x32xf32, #tpu.memory_space<vmem>>, vector<24x32xf32>
    %90 = vector.shape_cast %89 : vector<24x32xf32> to vector<1x24x32xf32>
    %91 = vector.broadcast %90 : vector<1x24x32xf32> to vector<2x24x32xf32>
    %92 = arith.addf %88, %91 : vector<2x24x32xf32>
    %93 = vector.shape_cast %83 : vector<2x24x32xf32> to vector<48x32xf32>
    %94 = vector.shape_cast %92 : vector<2x24x32xf32> to vector<48x32xf32>
    %95 = arith.truncf %93 : vector<48x32xf32> to vector<48x32xbf16>
    %c0_29 = arith.constant 0 : index
    %c0_30 = arith.constant 0 : index
    %96 = vector.load %arg5[%c0_29, %c0_30] : memref<32x32xbf16, #tpu.memory_space<vmem>>, vector<32x32xbf16>
    %cst_31 = arith.constant dense<0.000000e+00> : vector<48x32xf32>
    %97 = tpu.matmul %95, %96, %cst_31 {dimension_numbers = #tpu.dot_dimension_numbers<[1], [0], [0], [1], [0, 0, 1, 1], [], []>} : vector<48x32xbf16>, vector<32x32xbf16>, vector<48x32xf32> -> vector<48x32xf32>
    %98 = arith.addf %94, %97 : vector<48x32xf32>
    %99 = vector.extract_strided_slice %0 {offsets = [0, 0], sizes = [1, 32], strides = [1, 1]} : vector<6x32xf32> to vector<1x32xf32>
    %100 = vector.extract_strided_slice %0 {offsets = [1, 0], sizes = [1, 32], strides = [1, 1]} : vector<6x32xf32> to vector<1x32xf32>
    %cst_32 = arith.constant dense<0.000000e+00> : vector<48xf32>
    %101 = vector.multi_reduction <add>, %98, %cst_32 [1] : vector<48x32xf32> to vector<48xf32>
    %102 = vector.shape_cast %101 : vector<48xf32> to vector<48x1xf32>
    %cst_33 = arith.constant 3.200000e+01 : f32
    %103 = vector.broadcast %cst_33 : f32 to vector<48x1xf32>
    %104 = arith.divf %102, %103 : vector<48x1xf32>
    %105 = arith.mulf %98, %98 : vector<48x32xf32>
    %cst_34 = arith.constant dense<0.000000e+00> : vector<48xf32>
    %106 = vector.multi_reduction <add>, %105, %cst_34 [1] : vector<48x32xf32> to vector<48xf32>
    %107 = vector.shape_cast %106 : vector<48xf32> to vector<48x1xf32>
    %cst_35 = arith.constant 3.200000e+01 : f32
    %108 = vector.broadcast %cst_35 : f32 to vector<48x1xf32>
    %109 = arith.divf %107, %108 : vector<48x1xf32>
    %110 = arith.mulf %104, %104 : vector<48x1xf32>
    %111 = arith.subf %109, %110 : vector<48x1xf32>
    %cst_36 = arith.constant 0.000000e+00 : f32
    %112 = vector.broadcast %cst_36 : f32 to vector<48x1xf32>
    %113 = arith.maximumf %111, %112 : vector<48x1xf32>
    %114 = vector.broadcast %104 : vector<48x1xf32> to vector<48x32xf32>
    %115 = arith.subf %98, %114 : vector<48x32xf32>
    %cst_37 = arith.constant 9.99999974E-6 : f32
    %116 = vector.broadcast %cst_37 : f32 to vector<48x1xf32>
    %117 = arith.addf %113, %116 : vector<48x1xf32>
    %118 = math.rsqrt %117 : vector<48x1xf32>
    %119 = vector.broadcast %118 : vector<48x1xf32> to vector<48x32xf32>
    %120 = arith.mulf %115, %119 : vector<48x32xf32>
    %121 = vector.broadcast %99 : vector<1x32xf32> to vector<48x32xf32>
    %122 = arith.mulf %120, %121 : vector<48x32xf32>
    %123 = vector.broadcast %100 : vector<1x32xf32> to vector<48x32xf32>
    %124 = arith.addf %122, %123 : vector<48x32xf32>
    %125 = arith.truncf %124 : vector<48x32xf32> to vector<48x32xbf16>
    %c0_38 = arith.constant 0 : index
    %c0_39 = arith.constant 0 : index
    %126 = vector.load %arg7[%c0_38, %c0_39] : memref<32x64xbf16, #tpu.memory_space<vmem>>, vector<32x64xbf16>
    %cst_40 = arith.constant dense<0.000000e+00> : vector<48x64xf32>
    %127 = tpu.matmul %125, %126, %cst_40 {dimension_numbers = #tpu.dot_dimension_numbers<[1], [0], [0], [1], [0, 0, 1, 1], [], []>} : vector<48x32xbf16>, vector<32x64xbf16>, vector<48x64xf32> -> vector<48x64xf32>
    %128 = vector.extract_strided_slice %1 {offsets = [0, 0], sizes = [1, 64], strides = [1, 1]} : vector<3x64xf32> to vector<1x64xf32>
    %129 = vector.broadcast %128 : vector<1x64xf32> to vector<48x64xf32>
    %130 = arith.addf %127, %129 : vector<48x64xf32>
    %131 = vector.extract_strided_slice %1 {offsets = [1, 0], sizes = [1, 64], strides = [1, 1]} : vector<3x64xf32> to vector<1x64xf32>
    %132 = vector.extract_strided_slice %1 {offsets = [2, 0], sizes = [1, 64], strides = [1, 1]} : vector<3x64xf32> to vector<1x64xf32>
    %cst_41 = arith.constant dense<0.000000e+00> : vector<48xf32>
    %133 = vector.multi_reduction <add>, %130, %cst_41 [1] : vector<48x64xf32> to vector<48xf32>
    %134 = vector.shape_cast %133 : vector<48xf32> to vector<48x1xf32>
    %cst_42 = arith.constant 6.400000e+01 : f32
    %135 = vector.broadcast %cst_42 : f32 to vector<48x1xf32>
    %136 = arith.divf %134, %135 : vector<48x1xf32>
    %137 = arith.mulf %130, %130 : vector<48x64xf32>
    %cst_43 = arith.constant dense<0.000000e+00> : vector<48xf32>
    %138 = vector.multi_reduction <add>, %137, %cst_43 [1] : vector<48x64xf32> to vector<48xf32>
    %139 = vector.shape_cast %138 : vector<48xf32> to vector<48x1xf32>
    %cst_44 = arith.constant 6.400000e+01 : f32
    %140 = vector.broadcast %cst_44 : f32 to vector<48x1xf32>
    %141 = arith.divf %139, %140 : vector<48x1xf32>
    %142 = arith.mulf %136, %136 : vector<48x1xf32>
    %143 = arith.subf %141, %142 : vector<48x1xf32>
    %cst_45 = arith.constant 0.000000e+00 : f32
    %144 = vector.broadcast %cst_45 : f32 to vector<48x1xf32>
    %145 = arith.maximumf %143, %144 : vector<48x1xf32>
    %146 = vector.broadcast %136 : vector<48x1xf32> to vector<48x64xf32>
    %147 = arith.subf %130, %146 : vector<48x64xf32>
    %cst_46 = arith.constant 9.99999974E-6 : f32
    %148 = vector.broadcast %cst_46 : f32 to vector<48x1xf32>
    %149 = arith.addf %145, %148 : vector<48x1xf32>
    %150 = math.rsqrt %149 : vector<48x1xf32>
    %151 = vector.broadcast %150 : vector<48x1xf32> to vector<48x64xf32>
    %152 = arith.mulf %147, %151 : vector<48x64xf32>
    %153 = vector.broadcast %131 : vector<1x64xf32> to vector<48x64xf32>
    %154 = arith.mulf %152, %153 : vector<48x64xf32>
    %155 = vector.broadcast %132 : vector<1x64xf32> to vector<48x64xf32>
    %156 = arith.addf %154, %155 : vector<48x64xf32>
    %cst_47 = arith.constant 0.000000e+00 : f32
    %157 = vector.broadcast %cst_47 : f32 to vector<48x64xf32>
    %158 = arith.maximumf %156, %157 : vector<48x64xf32>
    %159 = arith.truncf %158 : vector<48x64xf32> to vector<48x64xbf16>
    %c0_48 = arith.constant 0 : index
    %c0_49 = arith.constant 0 : index
    %160 = vector.load %arg9[%c0_48, %c0_49] : memref<64x48xbf16, #tpu.memory_space<vmem>>, vector<64x48xbf16>
    %cst_50 = arith.constant dense<0.000000e+00> : vector<48x48xf32>
    %161 = tpu.matmul %159, %160, %cst_50 {dimension_numbers = #tpu.dot_dimension_numbers<[1], [0], [0], [1], [0, 0, 1, 1], [], []>} : vector<48x64xbf16>, vector<64x48xbf16>, vector<48x48xf32> -> vector<48x48xf32>
    %162 = vector.extract_strided_slice %2 {offsets = [0, 0], sizes = [1, 48], strides = [1, 1]} : vector<3x48xf32> to vector<1x48xf32>
    %163 = vector.broadcast %162 : vector<1x48xf32> to vector<48x48xf32>
    %164 = arith.addf %161, %163 : vector<48x48xf32>
    %165 = vector.extract_strided_slice %2 {offsets = [1, 0], sizes = [1, 48], strides = [1, 1]} : vector<3x48xf32> to vector<1x48xf32>
    %166 = vector.extract_strided_slice %2 {offsets = [2, 0], sizes = [1, 48], strides = [1, 1]} : vector<3x48xf32> to vector<1x48xf32>
    %cst_51 = arith.constant dense<0.000000e+00> : vector<48xf32>
    %167 = vector.multi_reduction <add>, %164, %cst_51 [1] : vector<48x48xf32> to vector<48xf32>
    %168 = vector.shape_cast %167 : vector<48xf32> to vector<48x1xf32>
    %cst_52 = arith.constant 4.800000e+01 : f32
    %169 = vector.broadcast %cst_52 : f32 to vector<48x1xf32>
    %170 = arith.divf %168, %169 : vector<48x1xf32>
    %171 = arith.mulf %164, %164 : vector<48x48xf32>
    %cst_53 = arith.constant dense<0.000000e+00> : vector<48xf32>
    %172 = vector.multi_reduction <add>, %171, %cst_53 [1] : vector<48x48xf32> to vector<48xf32>
    %173 = vector.shape_cast %172 : vector<48xf32> to vector<48x1xf32>
    %cst_54 = arith.constant 4.800000e+01 : f32
    %174 = vector.broadcast %cst_54 : f32 to vector<48x1xf32>
    %175 = arith.divf %173, %174 : vector<48x1xf32>
    %176 = arith.mulf %170, %170 : vector<48x1xf32>
    %177 = arith.subf %175, %176 : vector<48x1xf32>
    %cst_55 = arith.constant 0.000000e+00 : f32
    %178 = vector.broadcast %cst_55 : f32 to vector<48x1xf32>
    %179 = arith.maximumf %177, %178 : vector<48x1xf32>
    %180 = vector.broadcast %170 : vector<48x1xf32> to vector<48x48xf32>
    %181 = arith.subf %164, %180 : vector<48x48xf32>
    %cst_56 = arith.constant 9.99999974E-6 : f32
    %182 = vector.broadcast %cst_56 : f32 to vector<48x1xf32>
    %183 = arith.addf %179, %182 : vector<48x1xf32>
    %184 = math.rsqrt %183 : vector<48x1xf32>
    %185 = vector.broadcast %184 : vector<48x1xf32> to vector<48x48xf32>
    %186 = arith.mulf %181, %185 : vector<48x48xf32>
    %187 = vector.broadcast %165 : vector<1x48xf32> to vector<48x48xf32>
    %188 = arith.mulf %186, %187 : vector<48x48xf32>
    %189 = vector.broadcast %166 : vector<1x48xf32> to vector<48x48xf32>
    %190 = arith.addf %188, %189 : vector<48x48xf32>
    %cst_57 = arith.constant 0.000000e+00 : f32
    %191 = vector.broadcast %cst_57 : f32 to vector<48x48xf32>
    %192 = arith.maximumf %190, %191 : vector<48x48xf32>
    %193 = arith.truncf %192 : vector<48x48xf32> to vector<48x48xbf16>
    %c0_58 = arith.constant 0 : index
    %c0_59 = arith.constant 0 : index
    %194 = vector.load %arg11[%c0_58, %c0_59] : memref<48x32xbf16, #tpu.memory_space<vmem>>, vector<48x32xbf16>
    %cst_60 = arith.constant dense<0.000000e+00> : vector<48x32xf32>
    %195 = tpu.matmul %193, %194, %cst_60 {dimension_numbers = #tpu.dot_dimension_numbers<[1], [0], [0], [1], [0, 0, 1, 1], [], []>} : vector<48x48xbf16>, vector<48x32xbf16>, vector<48x32xf32> -> vector<48x32xf32>
    %196 = vector.extract_strided_slice %0 {offsets = [2, 0], sizes = [1, 32], strides = [1, 1]} : vector<6x32xf32> to vector<1x32xf32>
    %197 = vector.broadcast %196 : vector<1x32xf32> to vector<48x32xf32>
    %198 = arith.addf %195, %197 : vector<48x32xf32>
    %199 = arith.addf %124, %198 : vector<48x32xf32>
    %200 = vector.extract_strided_slice %0 {offsets = [3, 0], sizes = [1, 32], strides = [1, 1]} : vector<6x32xf32> to vector<1x32xf32>
    %201 = vector.extract_strided_slice %0 {offsets = [4, 0], sizes = [1, 32], strides = [1, 1]} : vector<6x32xf32> to vector<1x32xf32>
    %cst_61 = arith.constant dense<0.000000e+00> : vector<48xf32>
    %202 = vector.multi_reduction <add>, %199, %cst_61 [1] : vector<48x32xf32> to vector<48xf32>
    %203 = vector.shape_cast %202 : vector<48xf32> to vector<48x1xf32>
    %cst_62 = arith.constant 3.200000e+01 : f32
    %204 = vector.broadcast %cst_62 : f32 to vector<48x1xf32>
    %205 = arith.divf %203, %204 : vector<48x1xf32>
    %206 = arith.mulf %199, %199 : vector<48x32xf32>
    %cst_63 = arith.constant dense<0.000000e+00> : vector<48xf32>
    %207 = vector.multi_reduction <add>, %206, %cst_63 [1] : vector<48x32xf32> to vector<48xf32>
    %208 = vector.shape_cast %207 : vector<48xf32> to vector<48x1xf32>
    %cst_64 = arith.constant 3.200000e+01 : f32
    %209 = vector.broadcast %cst_64 : f32 to vector<48x1xf32>
    %210 = arith.divf %208, %209 : vector<48x1xf32>
    %211 = arith.mulf %205, %205 : vector<48x1xf32>
    %212 = arith.subf %210, %211 : vector<48x1xf32>
    %cst_65 = arith.constant 0.000000e+00 : f32
    %213 = vector.broadcast %cst_65 : f32 to vector<48x1xf32>
    %214 = arith.maximumf %212, %213 : vector<48x1xf32>
    %215 = vector.broadcast %205 : vector<48x1xf32> to vector<48x32xf32>
    %216 = arith.subf %199, %215 : vector<48x32xf32>
    %cst_66 = arith.constant 9.99999974E-6 : f32
    %217 = vector.broadcast %cst_66 : f32 to vector<48x1xf32>
    %218 = arith.addf %214, %217 : vector<48x1xf32>
    %219 = math.rsqrt %218 : vector<48x1xf32>
    %220 = vector.broadcast %219 : vector<48x1xf32> to vector<48x32xf32>
    %221 = arith.mulf %216, %220 : vector<48x32xf32>
    %222 = vector.broadcast %200 : vector<1x32xf32> to vector<48x32xf32>
    %223 = arith.mulf %221, %222 : vector<48x32xf32>
    %224 = vector.broadcast %201 : vector<1x32xf32> to vector<48x32xf32>
    %225 = arith.addf %223, %224 : vector<48x32xf32>
    %226 = vector.shape_cast %225 : vector<48x32xf32> to vector<2x24x32xf32>
    %c0_67 = arith.constant 0 : index
    %c0_68 = arith.constant 0 : index
    %c0_69 = arith.constant 0 : index
    %227 = vector.load %arg12[%c0_67, %c0_68, %c0_69] : memref<2x24x32xf32, #tpu.memory_space<vmem>>, vector<2x24x32xf32>
    tpu.vector_store %arg12[%c0_67, %c0_68, %c0_69], %226 {strides = array<i32>} : memref<2x24x32xf32, #tpu.memory_space<vmem>>, vector<2x24x32xf32>,
    return
  }
  func.func @transform_0(%arg0: i32) -> (i32, i32, i32) {
    %c0_i32 = arith.constant 0 : i32
    %c0_i32_0 = arith.constant 0 : i32
    %c0_i32_1 = arith.constant 0 : i32
    return %arg0, %c0_i32, %c0_i32_0 : i32, i32, i32
  }
  func.func @transform_1(%arg0: i32) -> (i32, i32) {
    %c0_i32 = arith.constant 0 : i32
    %c0_i32_0 = arith.constant 0 : i32
    %c0_i32_1 = arith.constant 0 : i32
    return %c0_i32, %c0_i32_0 : i32, i32
  }
  func.func @transform_2(%arg0: i32) -> (i32, i32, i32) {
    %c0_i32 = arith.constant 0 : i32
    %c0_i32_0 = arith.constant 0 : i32
    %c0_i32_1 = arith.constant 0 : i32
    %c0_i32_2 = arith.constant 0 : i32
    return %c0_i32, %c0_i32_0, %c0_i32_1 : i32, i32, i32
  }
  func.func @transform_3(%arg0: i32) -> (i32, i32) {
    %c0_i32 = arith.constant 0 : i32
    %c0_i32_0 = arith.constant 0 : i32
    %c0_i32_1 = arith.constant 0 : i32
    return %c0_i32, %c0_i32_0 : i32, i32
  }
  func.func @transform_4(%arg0: i32) -> (i32, i32) {
    %c0_i32 = arith.constant 0 : i32
    %c0_i32_0 = arith.constant 0 : i32
    %c0_i32_1 = arith.constant 0 : i32
    return %c0_i32, %c0_i32_0 : i32, i32
  }
  func.func @transform_5(%arg0: i32) -> (i32, i32) {
    %c0_i32 = arith.constant 0 : i32
    %c0_i32_0 = arith.constant 0 : i32
    %c0_i32_1 = arith.constant 0 : i32
    return %c0_i32, %c0_i32_0 : i32, i32
  }
  func.func @transform_6(%arg0: i32) -> (i32, i32) {
    %c0_i32 = arith.constant 0 : i32
    %c0_i32_0 = arith.constant 0 : i32
    %c0_i32_1 = arith.constant 0 : i32
    return %c0_i32, %c0_i32_0 : i32, i32
  }
  func.func @transform_7(%arg0: i32) -> (i32, i32) {
    %c0_i32 = arith.constant 0 : i32
    %c0_i32_0 = arith.constant 0 : i32
    %c0_i32_1 = arith.constant 0 : i32
    return %c0_i32, %c0_i32_0 : i32, i32
  }
  func.func @transform_8(%arg0: i32) -> (i32, i32) {
    %c0_i32 = arith.constant 0 : i32
    %c0_i32_0 = arith.constant 0 : i32
    %c0_i32_1 = arith.constant 0 : i32
    return %c0_i32, %c0_i32_0 : i32, i32
  }
  func.func @transform_9(%arg0: i32) -> (i32, i32) {
    %c0_i32 = arith.constant 0 : i32
    %c0_i32_0 = arith.constant 0 : i32
    %c0_i32_1 = arith.constant 0 : i32
    return %c0_i32, %c0_i32_0 : i32, i32
  }
  func.func @transform_10(%arg0: i32) -> (i32, i32) {
    %c0_i32 = arith.constant 0 : i32
    %c0_i32_0 = arith.constant 0 : i32
    %c0_i32_1 = arith.constant 0 : i32
    return %c0_i32, %c0_i32_0 : i32, i32
  }
  func.func @transform_11(%arg0: i32) -> (i32, i32, i32) {
    %c0_i32 = arith.constant 0 : i32
    %c0_i32_0 = arith.constant 0 : i32
    %c0_i32_1 = arith.constant 0 : i32
    return %arg0, %c0_i32, %c0_i32_0 : i32, i32, i32
  }
}

</mosaic_0001>

<llo_original>
// kernel: sub.1
$region0: #{sub.1}
  #allocation0 [shape = 's32[1]{0}', space=sflag, size = 0x4, scoped, tag = 'scoped memory for sub.1']
  %s0 = inlined_call_operand.vmem [shape: f32[2,32], index: 0, kind: input, shape index: {}]
  %s1 = inlined_call_operand.vmem [shape: f32[2,32], index: 1, kind: input, shape index: {}]
  %s2 = inlined_call_operand.vmem [shape: f32[2,32], index: 2, kind: output, shape index: {}]
  %v3 = vld [vmem:[%s0] sm:$0x3]
  %v4 = vld [vmem:[%s1] sm:$0x3]
  %5 = xla_tuple %v3, %v4
  %6 = xla_tuple %5
  %v7 = vsub.f32 %v3, %v4
  %8 = xla_tuple %v7
  %9 = vst [vmem:[%s2] sm:$0x3] %v7

// kernel: transformer_encoder.1
$region0: #{transformer_encoder.1}
  #allocation0 [shape = 'u32[]', space=smem, size = 0x4, offset = 0x4, fixed_abs, tag = 'smem constant byte address 0x4 - core index']
  #allocation1 [shape = 'u32[72,128]{1,0:T(1,128)}', space=vmem, size = 0x9000, scoped, tag = 'internal scratch']
  %s0 = inlined_call_operand.vmem [shape: f32[4,24,1], index: 0, kind: input, shape index: {}]
  %s1 = inlined_call_operand.vmem [shape: f32[2,96], index: 1, kind: input, shape index: {}]
  %s2 = inlined_call_operand.vmem [shape: f32[2,24,96], index: 2, kind: input, shape index: {}]
  %s3 = inlined_call_operand.vmem [shape: f32[24,32], index: 3, kind: input, shape index: {}]
  %s4 = inlined_call_operand.vmem [shape: bf16[32,32], index: 4, kind: input, shape index: {}]
  %s5 = inlined_call_operand.vmem [shape: f32[6,32], index: 5, kind: input, shape index: {}]
  %s6 = inlined_call_operand.vmem [shape: bf16[32,64], index: 6, kind: input, shape index: {}]
  %s7 = inlined_call_operand.vmem [shape: f32[3,64], index: 7, kind: input, shape index: {}]
  %s8 = inlined_call_operand.vmem [shape: bf16[64,48], index: 8, kind: input, shape index: {}]
  %s9 = inlined_call_operand.vmem [shape: f32[3,48], index: 9, kind: input, shape index: {}]
  %s10 = inlined_call_operand.vmem [shape: bf16[48,32], index: 10, kind: input, shape index: {}]
  %s11 = inlined_call_operand.vmem [shape: f32[4,24,32], index: 11, kind: output, shape index: {}]
  %s12 = sld [smem:[#allocation0]]
  $region77: #{transformer_encoder.1} parent=0
    _
  %s14 = ssub.s32 1, %s12
  %s15 = scalar_select 0, %s14, %s12
  loop: start=0, step=1, limit=4
  $region2: #{transformer_encoder.1} parent=0 // loop_pre_header
    _
  $region3: #{transformer_encoder.1} parent=0 // loop_header
    %s17 = sphi 0, %s21
    %p18 = scmp.ge.s32.totalorder %s17, 4
    %s27 = sphi 0, %s29
    %s30 = sphi 0, %s27
    %s31 = sphi 0, %s30
    %s47 = sphi 0, %s31
    %s51 = sphi 0, %s51
    %s53 = sphi 0, %s51
    %s54 = sphi 0, %s53
    %s68 = sphi 0, %s54
    %s72 = sphi 0, %s72
    %s74 = sphi 0, %s72
    %s75 = sphi 0, %s74
    %s89 = sphi 0, %s75
    %s93 = sphi 0, %s93
    %s95 = sphi 0, %s93
    %s96 = sphi 0, %s95
    %s110 = sphi 0, %s96
    %s114 = sphi 0, %s114
    %s116 = sphi 0, %s114
    %s117 = sphi 0, %s116
    %s131 = sphi 0, %s117
    %s135 = sphi 0, %s135
    %s137 = sphi 0, %s135
    %s138 = sphi 0, %s137
    %s152 = sphi 0, %s138
    %s156 = sphi 0, %s156
    %s158 = sphi 0, %s156
    %s159 = sphi 0, %s158
    %s173 = sphi 0, %s159
    %s177 = sphi 0, %s177
    %s179 = sphi 0, %s177
    %s180 = sphi 0, %s179
    %s194 = sphi 0, %s180
    %s198 = sphi 0, %s198
    %s200 = sphi 0, %s198
    %s201 = sphi 0, %s200
    %s215 = sphi 0, %s201
    %s219 = sphi 0, %s219
    %s221 = sphi 0, %s219
    %s222 = sphi 0, %s221
    %s236 = sphi 0, %s222
    %s240 = sphi 0, %s240
    %s242 = sphi 0, %s240
    %s243 = sphi 0, %s242
    %s257 = sphi 0, %s243
    %s263 = sphi 0, %s265
    %s266 = sphi 0, %s263
    %s267 = sphi 0, %s266
    %s283 = sphi 0, %s267
  $region4: #{transformer_encoder.1} parent=0 // loop_header_branch
    %20 = sbr.rel (%p18) target = $region8
  $region5: #{transformer_encoder.1} parent=0 // loop_body
    %s22 = ssub.s32 %s17, 1
    %s23 = ssub.s32 %s17, 2
    %s24 = sadd.s32 %s17, 1
    %s25 = ssub.s32 %s17, %s24
    %p26 = scmp.eq.s32.totalorder %s25, 0
    %s28 = sadd.s32 %s27, 1
    %s29 = scalar_select %p26, %s27, %s28
    %p32 = pneg %p26
    %p33 = scmp.eq.s32.totalorder %s17, 1
    %p34 = por %p32, %p33
    %p35 = scmp.ne.s32.totalorder %s27, %s30
    %p36 = scmp.eq.s32.totalorder %s17, 0
    %p37 = por %p35, %p36
    %p38 = scmp.ne.s32.totalorder %s27, %s30
    %p39 = scmp.eq.s32.totalorder %s22, 1
    %p40 = por %p38, %p39
    %p41 = scmp.ne.s32.totalorder %s30, %s31
    %p42 = scmp.eq.s32.totalorder %s22, 0
    %p43 = por %p41, %p42
    %p44 = scmp.ne.s32.totalorder %s30, %s31
    %p45 = scmp.eq.s32.totalorder %s23, 1
    %p46 = por %p44, %p45
    %p48 = scmp.ne.s32.totalorder %s31, %s47
    %p49 = scmp.eq.s32.totalorder %s23, 0
    %p50 = por %p48, %p49
    %s52 = sadd.s32 %s51, 1
    %p55 = scmp.eq.s32.totalorder %s17, 1
    %p56 = scmp.ne.s32.totalorder %s51, %s53
    %p57 = scmp.eq.s32.totalorder %s17, 0
    %p58 = por %p56, %p57
    %p59 = scmp.ne.s32.totalorder %s51, %s53
    %p60 = scmp.eq.s32.totalorder %s22, 1
    %p61 = por %p59, %p60
    %p62 = scmp.ne.s32.totalorder %s53, %s54
    %p63 = scmp.eq.s32.totalorder %s22, 0
    %p64 = por %p62, %p63
    %p65 = scmp.ne.s32.totalorder %s53, %s54
    %p66 = scmp.eq.s32.totalorder %s23, 1
    %p67 = por %p65, %p66
    %p69 = scmp.ne.s32.totalorder %s54, %s68
    %p70 = scmp.eq.s32.totalorder %s23, 0
    %p71 = por %p69, %p70
    %s73 = sadd.s32 %s72, 1
    %p76 = scmp.eq.s32.totalorder %s17, 1
    %p77 = scmp.ne.s32.totalorder %s72, %s74
    %p78 = scmp.eq.s32.totalorder %s17, 0
    %p79 = por %p77, %p78
    %p80 = scmp.ne.s32.totalorder %s72, %s74
    %p81 = scmp.eq.s32.totalorder %s22, 1
    %p82 = por %p80, %p81
    %p83 = scmp.ne.s32.totalorder %s74, %s75
    %p84 = scmp.eq.s32.totalorder %s22, 0
    %p85 = por %p83, %p84
    %p86 = scmp.ne.s32.totalorder %s74, %s75
    %p87 = scmp.eq.s32.totalorder %s23, 1
    %p88 = por %p86, %p87
    %p90 = scmp.ne.s32.totalorder %s75, %s89
    %p91 = scmp.eq.s32.totalorder %s23, 0
    %p92 = por %p90, %p91
    %s94 = sadd.s32 %s93, 1
    %p97 = scmp.eq.s32.totalorder %s17, 1
    %p98 = scmp.ne.s32.totalorder %s93, %s95
    %p99 = scmp.eq.s32.totalorder %s17, 0
    %p100 = por %p98, %p99
    %p101 = scmp.ne.s32.totalorder %s93, %s95
    %p102 = scmp.eq.s32.totalorder %s22, 1
    %p103 = por %p101, %p102
    %p104 = scmp.ne.s32.totalorder %s95, %s96
    %p105 = scmp.eq.s32.totalorder %s22, 0
    %p106 = por %p104, %p105
    %p107 = scmp.ne.s32.totalorder %s95, %s96
    %p108 = scmp.eq.s32.totalorder %s23, 1
    %p109 = por %p107, %p108
    %p111 = scmp.ne.s32.totalorder %s96, %s110
    %p112 = scmp.eq.s32.totalorder %s23, 0
    %p113 = por %p111, %p112
    %s115 = sadd.s32 %s114, 1
    %p118 = scmp.eq.s32.totalorder %s17, 1
    %p119 = scmp.ne.s32.totalorder %s114, %s116
    %p120 = scmp.eq.s32.totalorder %s17, 0
    %p121 = por %p119, %p120
    %p122 = scmp.ne.s32.totalorder %s114, %s116
    %p123 = scmp.eq.s32.totalorder %s22, 1
    %p124 = por %p122, %p123
    %p125 = scmp.ne.s32.totalorder %s116, %s117
    %p126 = scmp.eq.s32.totalorder %s22, 0
    %p127 = por %p125, %p126
    %p128 = scmp.ne.s32.totalorder %s116, %s117
    %p129 = scmp.eq.s32.totalorder %s23, 1
    %p130 = por %p128, %p129
    %p132 = scmp.ne.s32.totalorder %s117, %s131
    %p133 = scmp.eq.s32.totalorder %s23, 0
    %p134 = por %p132, %p133
    %s136 = sadd.s32 %s135, 1
    %p139 = scmp.eq.s32.totalorder %s17, 1
    %p140 = scmp.ne.s32.totalorder %s135, %s137
    %p141 = scmp.eq.s32.totalorder %s17, 0
    %p142 = por %p140, %p141
    %p143 = scmp.ne.s32.totalorder %s135, %s137
    %p144 = scmp.eq.s32.totalorder %s22, 1
    %p145 = por %p143, %p144
    %p146 = scmp.ne.s32.totalorder %s137, %s138
    %p147 = scmp.eq.s32.totalorder %s22, 0
    %p148 = por %p146, %p147
    %p149 = scmp.ne.s32.totalorder %s137, %s138
    %p150 = scmp.eq.s32.totalorder %s23, 1
    %p151 = por %p149, %p150
    %p153 = scmp.ne.s32.totalorder %s138, %s152
    %p154 = scmp.eq.s32.totalorder %s23, 0
    %p155 = por %p153, %p154
    %s157 = sadd.s32 %s156, 1
    %p160 = scmp.eq.s32.totalorder %s17, 1
    %p161 = scmp.ne.s32.totalorder %s156, %s158
    %p162 = scmp.eq.s32.totalorder %s17, 0
    %p163 = por %p161, %p162
    %p164 = scmp.ne.s32.totalorder %s156, %s158
    %p165 = scmp.eq.s32.totalorder %s22, 1
    %p166 = por %p164, %p165
    %p167 = scmp.ne.s32.totalorder %s158, %s159
    %p168 = scmp.eq.s32.totalorder %s22, 0
    %p169 = por %p167, %p168
    %p170 = scmp.ne.s32.totalorder %s158, %s159
    %p171 = scmp.eq.s32.totalorder %s23, 1
    %p172 = por %p170, %p171
    %p174 = scmp.ne.s32.totalorder %s159, %s173
    %p175 = scmp.eq.s32.totalorder %s23, 0
    %p176 = por %p174, %p175
    %s178 = sadd.s32 %s177, 1
    %p181 = scmp.eq.s32.totalorder %s17, 1
    %p182 = scmp.ne.s32.totalorder %s177, %s179
    %p183 = scmp.eq.s32.totalorder %s17, 0
    %p184 = por %p182, %p183
    %p185 = scmp.ne.s32.totalorder %s177, %s179
    %p186 = scmp.eq.s32.totalorder %s22, 1
    %p187 = por %p185, %p186
    %p188 = scmp.ne.s32.totalorder %s179, %s180
    %p189 = scmp.eq.s32.totalorder %s22, 0
    %p190 = por %p188, %p189
    %p191 = scmp.ne.s32.totalorder %s179, %s180
    %p192 = scmp.eq.s32.totalorder %s23, 1
    %p193 = por %p191, %p192
    %p195 = scmp.ne.s32.totalorder %s180, %s194
    %p196 = scmp.eq.s32.totalorder %s23, 0
    %p197 = por %p195, %p196
    %s199 = sadd.s32 %s198, 1
    %p202 = scmp.eq.s32.totalorder %s17, 1
    %p203 = scmp.ne.s32.totalorder %s198, %s200
    %p204 = scmp.eq.s32.totalorder %s17, 0
    %p205 = por %p203, %p204
    %p206 = scmp.ne.s32.totalorder %s198, %s200
    %p207 = scmp.eq.s32.totalorder %s22, 1
    %p208 = por %p206, %p207
    %p209 = scmp.ne.s32.totalorder %s200, %s201
    %p210 = scmp.eq.s32.totalorder %s22, 0
    %p211 = por %p209, %p210
    %p212 = scmp.ne.s32.totalorder %s200, %s201
    %p213 = scmp.eq.s32.totalorder %s23, 1
    %p214 = por %p212, %p213
    %p216 = scmp.ne.s32.totalorder %s201, %s215
    %p217 = scmp.eq.s32.totalorder %s23, 0
    %p218 = por %p216, %p217
    %s220 = sadd.s32 %s219, 1
    %p223 = scmp.eq.s32.totalorder %s17, 1
    %p224 = scmp.ne.s32.totalorder %s219, %s221
    %p225 = scmp.eq.s32.totalorder %s17, 0
    %p226 = por %p224, %p225
    %p227 = scmp.ne.s32.totalorder %s219, %s221
    %p228 = scmp.eq.s32.totalorder %s22, 1
    %p229 = por %p227, %p228
    %p230 = scmp.ne.s32.totalorder %s221, %s222
    %p231 = scmp.eq.s32.totalorder %s22, 0
    %p232 = por %p230, %p231
    %p233 = scmp.ne.s32.totalorder %s221, %s222
    %p234 = scmp.eq.s32.totalorder %s23, 1
    %p235 = por %p233, %p234
    %p237 = scmp.ne.s32.totalorder %s222, %s236
    %p238 = scmp.eq.s32.totalorder %s23, 0
    %p239 = por %p237, %p238
    %s241 = sadd.s32 %s240, 1
    %p244 = scmp.eq.s32.totalorder %s17, 1
    %p245 = scmp.ne.s32.totalorder %s240, %s242
    %p246 = scmp.eq.s32.totalorder %s17, 0
    %p247 = por %p245, %p246
    %p248 = scmp.ne.s32.totalorder %s240, %s242
    %p249 = scmp.eq.s32.totalorder %s22, 1
    %p250 = por %p248, %p249
    %p251 = scmp.ne.s32.totalorder %s242, %s243
    %p252 = scmp.eq.s32.totalorder %s22, 0
    %p253 = por %p251, %p252
    %p254 = scmp.ne.s32.totalorder %s242, %s243
    %p255 = scmp.eq.s32.totalorder %s23, 1
    %p256 = por %p254, %p255
    %p258 = scmp.ne.s32.totalorder %s243, %s257
    %p259 = scmp.eq.s32.totalorder %s23, 0
    %p260 = por %p258, %p259
    %s261 = ssub.s32 %s17, %s24
    %p262 = scmp.eq.s32.totalorder %s261, 0
    %s264 = sadd.s32 %s263, 1
    %s265 = scalar_select %p262, %s263, %s264
    %p268 = pneg %p262
    %p269 = scmp.eq.s32.totalorder %s17, 1
    %p270 = por %p268, %p269
    %p271 = scmp.ne.s32.totalorder %s263, %s266
    %p272 = scmp.eq.s32.totalorder %s17, 0
    %p273 = por %p271, %p272
    %p274 = scmp.ne.s32.totalorder %s263, %s266
    %p275 = scmp.eq.s32.totalorder %s22, 1
    %p276 = por %p274, %p275
    %p277 = scmp.ne.s32.totalorder %s266, %s267
    %p278 = scmp.eq.s32.totalorder %s22, 0
    %p279 = por %p277, %p278
    %p280 = scmp.ne.s32.totalorder %s266, %s267
    %p281 = scmp.eq.s32.totalorder %s23, 1
    %p282 = por %p280, %p281
    %p284 = scmp.ne.s32.totalorder %s267, %s283
    %p285 = scmp.eq.s32.totalorder %s23, 0
    %p286 = por %p284, %p285
    %p287 = scmp.le.s32.totalorder 1, %s17
    %p288 = scmp.lt.s32.totalorder %s17, 3
    %p289 = pnand %p287, %p288
    %p290 = pneg %p289
    // Predicated region
    $region9: #{transformer_encoder.1} parent=5 // pred_check
      _
    $region10: #{transformer_encoder.1} parent=5 // pred_check_branch
      %292 = sbr.rel (%p289) target = $region12
    $region11: #{transformer_encoder.1} parent=5 // pred_region
      %s293 = ssub.s32 %s17, 1
      // Predicated region
      $region13: #{transformer_encoder.1} parent=11 // pred_check
        %p294 = pneg %p64
      $region14: #{transformer_encoder.1} parent=11 // pred_check_branch
        %296 = sbr.rel (%p294) target = $region16
      $region15: #{transformer_encoder.1} parent=11 // pred_region
        _
      $region16: #{transformer_encoder.1} parent=11 // pred_fallthru
        _
      // Predicated region
      $region17: #{transformer_encoder.1} parent=11 // pred_check
        %p297 = pneg %p85
      $region18: #{transformer_encoder.1} parent=11 // pred_check_branch
        %299 = sbr.rel (%p297) target = $region20
      $region19: #{transformer_encoder.1} parent=11 // pred_region
        _
      $region20: #{transformer_encoder.1} parent=11 // pred_fallthru
        _
      // Predicated region
      $region21: #{transformer_encoder.1} parent=11 // pred_check
        %p300 = pneg %p106
      $region22: #{transformer_encoder.1} parent=11 // pred_check_branch
        %302 = sbr.rel (%p300) target = $region24
      $region23: #{transformer_encoder.1} parent=11 // pred_region
        _
      $region24: #{transformer_encoder.1} parent=11 // pred_fallthru
        _
      // Predicated region
      $region25: #{transformer_encoder.1} parent=11 // pred_check
        %p303 = pneg %p127
      $region26: #{transformer_encoder.1} parent=11 // pred_check_branch
        %305 = sbr.rel (%p303) target = $region28
      $region27: #{transformer_encoder.1} parent=11 // pred_region
        _
      $region28: #{transformer_encoder.1} parent=11 // pred_fallthru
        _
      // Predicated region
      $region29: #{transformer_encoder.1} parent=11 // pred_check
        %p306 = pneg %p148
      $region30: #{transformer_encoder.1} parent=11 // pred_check_branch
        %308 = sbr.rel (%p306) target = $region32
      $region31: #{transformer_encoder.1} parent=11 // pred_region
        _
      $region32: #{transformer_encoder.1} parent=11 // pred_fallthru
        _
      // Predicated region
      $region33: #{transformer_encoder.1} parent=11 // pred_check
        %p309 = pneg %p169
      $region34: #{transformer_encoder.1} parent=11 // pred_check_branch
        %311 = sbr.rel (%p309) target = $region36
      $region35: #{transformer_encoder.1} parent=11 // pred_region
        _
      $region36: #{transformer_encoder.1} parent=11 // pred_fallthru
        _
      // Predicated region
      $region37: #{transformer_encoder.1} parent=11 // pred_check
        %p312 = pneg %p190
      $region38: #{transformer_encoder.1} parent=11 // pred_check_branch
        %314 = sbr.rel (%p312) target = $region40
      $region39: #{transformer_encoder.1} parent=11 // pred_region
        _
      $region40: #{transformer_encoder.1} parent=11 // pred_fallthru
        _
      // Predicated region
      $region41: #{transformer_encoder.1} parent=11 // pred_check
        %p315 = pneg %p211
      $region42: #{transformer_encoder.1} parent=11 // pred_check_branch
        %317 = sbr.rel (%p315) target = $region44
      $region43: #{transformer_encoder.1} parent=11 // pred_region
        _
      $region44: #{transformer_encoder.1} parent=11 // pred_fallthru
        _
      // Predicated region
      $region45: #{transformer_encoder.1} parent=11 // pred_check
        %p318 = pneg %p232
      $region46: #{transformer_encoder.1} parent=11 // pred_check_branch
        %320 = sbr.rel (%p318) target = $region48
      $region47: #{transformer_encoder.1} parent=11 // pred_region
        _
      $region48: #{transformer_encoder.1} parent=11 // pred_fallthru
        _
      // Predicated region
      $region49: #{transformer_encoder.1} parent=11 // pred_check
        %p321 = pneg %p253
      $region50: #{transformer_encoder.1} parent=11 // pred_check_branch
        %323 = sbr.rel (%p321) target = $region52
      $region51: #{transformer_encoder.1} parent=11 // pred_region
        _
      $region52: #{transformer_encoder.1} parent=11 // pred_fallthru
        _
    $region12: #{transformer_encoder.1} parent=5 // pred_fallthru
      _
    %p324 = scmp.lt.s32.totalorder %s17, 2
    // Predicated region
    $region53: #{transformer_encoder.1} parent=5 // pred_check
      %p325 = pneg %p324
    $region54: #{transformer_encoder.1} parent=5 // pred_check_branch
      %327 = sbr.rel (%p325) target = $region56
    $region55: #{transformer_encoder.1} parent=5 // pred_region
      // Predicated region
      $region57: #{transformer_encoder.1} parent=55 // pred_check
        %p328 = pneg %p37
      $region58: #{transformer_encoder.1} parent=55 // pred_check_branch
        %330 = sbr.rel (%p328) target = $region60
      $region59: #{transformer_encoder.1} parent=55 // pred_region
        %s331 = smul.u32 2, %s17
        %p332 = scmp.lt.s32.totalorder %s331, 3
        %s333 = scalar_select %p332, %s331, 3
        %s334 = smul.addr %s333, 3
        %s335 = smul.addr %s334, 8
        %s336 = scalar_lea.vmem %s0, %s335
        %s337 = smul.u32 2, %s17
      $region60: #{transformer_encoder.1} parent=55 // pred_fallthru
        _
    $region56: #{transformer_encoder.1} parent=5 // pred_fallthru
      _
    %p338 = scmp.le.s32.totalorder 1, %s17
    %p339 = scmp.lt.s32.totalorder %s17, 3
    %p340 = pnand %p338, %p339
    %p341 = pneg %p340
    // Predicated region
    $region61: #{transformer_encoder.1} parent=5 // pred_check
      _
    $region62: #{transformer_encoder.1} parent=5 // pred_check_branch
      %343 = sbr.rel (%p340) target = $region64
    $region63: #{transformer_encoder.1} parent=5 // pred_region
      %s344 = ssub.s32 %s17, 1
      %s345 = smul.u32 2, %s22
      %p346 = scmp.lt.s32.totalorder %s345, 3
      %s347 = scalar_select %p346, %s345, 3
      %s348 = smul.addr %s347, 3
      %s349 = smul.addr %s348, 8
      %s350 = scalar_lea.vmem %s0, %s349
      %p351 = pneg %p43
      %p352 = pneg %p40
      %p353 = pneg %p64
      %p354 = pneg %p61
      %p355 = pneg %p85
      %p356 = pneg %p82
      %p357 = pneg %p106
      %p358 = pneg %p103
      %p359 = pneg %p127
      %p360 = pneg %p124
      %p361 = pneg %p148
      %p362 = pneg %p145
      %p363 = pneg %p169
      %p364 = pneg %p166
      %p365 = pneg %p190
      %p366 = pneg %p187
      %p367 = pneg %p211
      %p368 = pneg %p208
      %p369 = pneg %p232
      %p370 = pneg %p229
      %p371 = pneg %p253
      %p372 = pneg %p250
      %p373 = pneg %p279
      %p374 = pneg %p276
      %s375 = smul.u32 2, %s22
      %p376 = scmp.lt.s32.totalorder %s375, 3
      %s377 = scalar_select %p376, %s375, 3
      %s378 = smul.addr %s377, 3
      %s379 = smul.addr %s378, 8
      %s380 = scalar_lea.vmem %s11, %s379
      %s381 = smul.u32 2, %s22
      %p382 = scmp.lt.s32.totalorder %s381, 3
      %s383 = scalar_select %p382, %s381, 3
      %s384 = smul.addr %s383, 3
      %s385 = smul.addr %s384, 8
      %s386 = scalar_lea.vmem %s0, %s385
      %s387 = smul.u32 2, %s22
      %s388 = smul.u32 2, %s22
      %p389 = scmp.lt.s32.totalorder %s388, 3
      %s390 = scalar_select %p389, %s388, 3
      %s391 = smul.addr %s390, 3
      %s392 = smul.addr %s391, 8
      %s393 = scalar_lea.vmem %s11, %s392
      %s394 = smul.u32 2, %s22
      %v396 = vld [vmem:[%s5] sm:$0x3f]
      %v397 = vld [vmem:[%s7] sm:$0x7]
      %v398 = vld [vmem:[%s9] sm:$0x7]
      %v399 = vld [vmem:[%s386] sm:$0xff]
      %v400 = vld [vmem:[%s386 + $0x8] sm:$0xff]
      %v401 = vld [vmem:[%s386 + $0x10] sm:$0xff]
      %v402 = vld [vmem:[%s386 + $0x18] sm:$0xff]
      %v403 = vld [vmem:[%s386 + $0x20] sm:$0xff]
      %v404 = vld [vmem:[%s386 + $0x28] sm:$0xff]
      %406 = vset.pattern.permute.xlu0 0
      %407 = vperm.xlu0 %406, %v399
      %v408 = vpop.permute.xlu0 %407
      %411 = vset.pattern.permute.xlu0 0
      %412 = vperm.xlu0 %411, %v400
      %v413 = vpop.permute.xlu0 %412
      %416 = vset.pattern.permute.xlu0 0
      %417 = vperm.xlu0 %416, %v401
      %v418 = vpop.permute.xlu0 %417
      %421 = vset.pattern.permute.xlu0 0
      %422 = vperm.xlu0 %421, %v402
      %v423 = vpop.permute.xlu0 %422
      %426 = vset.pattern.permute.xlu0 0
      %427 = vperm.xlu0 %426, %v403
      %v428 = vpop.permute.xlu0 %427
      %431 = vset.pattern.permute.xlu0 0
      %432 = vperm.xlu0 %431, %v404
      %v433 = vpop.permute.xlu0 %432
      %v435 = vlaneseq
      %v436 = vshrl.u32 %v435, 7
      %v437 = vadd.s32 %v436, 8
      %v438 = vadd.s32 %v436, 16
      %v439 = vlaneseq
      %v440 = vand.u32 %v439, 127
      %vm441 = vcmp.eq.s32.totalorder %v436, %v440
      %vm442 = vcmp.eq.s32.totalorder %v437, %v440
      %vm443 = vcmp.eq.s32.totalorder %v438, %v440
      %v444 = vsel %vm441, 1, 0
      %v445 = vsel %vm442, 1, 0
      %v446 = vsel %vm443, 1, 0
      %v447 = vcvt.s32.f32 %v444
      %v448 = vcvt.s32.f32 %v445
      %v449 = vcvt.s32.f32 %v446
      %vm450 = vcmp.lt.s32.totalorder %v440, 17
      %v451 = vld [vmem:[%s1] sm:$0x1]
      %v452 = vperm.slane %v451, 0
      %v453 = vmul.f32 %v408, %v452
      %v454 = vmul.f32 %v413, %v452
      %v455 = vmul.f32 %v418, %v452
      %v456 = vmul.f32 %v423, %v452
      %v457 = vmul.f32 %v428, %v452
      %v458 = vmul.f32 %v433, %v452
      %v459 = vld [vmem:[%s2] sm:$0xff]
      %v460 = vld [vmem:[%s2 + $0x8] sm:$0xff]
      %v461 = vld [vmem:[%s2 + $0x10] sm:$0xff]
      %v462 = vadd.f32 %v453, %v459
      %v463 = vadd.f32 %v454, %v460
      %v464 = vadd.f32 %v455, %v461
      %v465 = vadd.f32 %v456, %v459
      %v466 = vadd.f32 %v457, %v460
      %v467 = vadd.f32 %v458, %v461
      %471 = vrot.lane.b32.xlu0 %v462, 96
      %v472 = vpop.permute.xlu0 %471
      %473 = vrot.lane.b32.xlu0 %v463, 96
      %v474 = vpop.permute.xlu0 %473
      %475 = vrot.lane.b32.xlu0 %v464, 96
      %v476 = vpop.permute.xlu0 %475
      %vm477 = vcmask 261120
      %v478 = vsel %vm477, %v462, 0
      %v480 = vsel %vm477, %v463, 0
      %v482 = vsel %vm477, %v464, 0
      %v484 = vsel %vm477, %v472, 0
      %v486 = vsel %vm477, %v474, 0
      %v488 = vsel %vm477, %v476, 0
      %490 = vmatpush.xpose.msra.mxu0 0.0
      %491 = vmatpush.xpose.msra.mxu0 0.0
      %492 = vmatpush.xpose.msra.mxu0 0.0
      %493 = vmatpush.xpose.msra.mxu0 0.0
      %494 = vmatpush.xpose.msra.mxu0 0.0
      %495 = vmatpush.xpose.msra.mxu0 0.0
      %496 = vmatpush.xpose.msra.mxu0 0.0
      %497 = vmatpush.xpose.msra.mxu0 0.0
      %498 = vmatpush.xpose.msra.mxu0 0.0
      %499 = vmatpush.xpose.msra.mxu0 0.0
      %500 = vmatpush.xpose.msra.mxu0 0.0
      %501 = vmatpush.xpose.msra.mxu0 0.0
      %502 = vmatpush.xpose.msra.mxu0 0.0
      %503 = vmatpush.xpose.msra.mxu0 %v488
      %504 = vmatpush.xpose.msra.mxu0 %v486
      %505 = vmatpush.xpose.msra.mxu0 %v484
      %506 = vmatmul.f32.gmra.mxu0 %v478
      %v507 = vpop.f32.mrf.mxu0
      %v508 = vadd.f32 0.0, %v507
      %509 = vmatmul.f32.gmra.mxu0 %v480
      %v510 = vpop.f32.mrf.mxu0
      %v511 = vadd.f32 0.0, %v510
      %512 = vmatmul.f32.gmra.mxu0 %v482
      %v513 = vpop.f32.mrf.mxu0
      %v514 = vadd.f32 0.0, %v513
      %515 = vdwg.mxu0
      %519 = vrot.lane.b32.xlu0 %v465, 96
      %v520 = vpop.permute.xlu0 %519
      %521 = vrot.lane.b32.xlu0 %v466, 96
      %v522 = vpop.permute.xlu0 %521
      %523 = vrot.lane.b32.xlu0 %v467, 96
      %v524 = vpop.permute.xlu0 %523
      %v525 = vsel %vm477, %v465, 0
      %v527 = vsel %vm477, %v466, 0
      %v529 = vsel %vm477, %v467, 0
      %v531 = vsel %vm477, %v520, 0
      %v533 = vsel %vm477, %v522, 0
      %v535 = vsel %vm477, %v524, 0
      %537 = vmatpush.xpose.msra.mxu0 0.0
      %538 = vmatpush.xpose.msra.mxu0 0.0
      %539 = vmatpush.xpose.msra.mxu0 0.0
      %540 = vmatpush.xpose.msra.mxu0 0.0
      %541 = vmatpush.xpose.msra.mxu0 0.0
      %542 = vmatpush.xpose.msra.mxu0 0.0
      %543 = vmatpush.xpose.msra.mxu0 0.0
      %544 = vmatpush.xpose.msra.mxu0 0.0
      %545 = vmatpush.xpose.msra.mxu0 0.0
      %546 = vmatpush.xpose.msra.mxu0 0.0
      %547 = vmatpush.xpose.msra.mxu0 0.0
      %548 = vmatpush.xpose.msra.mxu0 0.0
      %549 = vmatpush.xpose.msra.mxu0 0.0
      %550 = vmatpush.xpose.msra.mxu0 %v535
      %551 = vmatpush.xpose.msra.mxu0 %v533
      %552 = vmatpush.xpose.msra.mxu0 %v531
      %553 = vmatmul.f32.gmra.mxu0 %v525
      %v554 = vpop.f32.mrf.mxu0
      %v555 = vadd.f32 0.0, %v554
      %556 = vmatmul.f32.gmra.mxu0 %v527
      %v557 = vpop.f32.mrf.mxu0
      %v558 = vadd.f32 0.0, %v557
      %559 = vmatmul.f32.gmra.mxu0 %v529
      %v560 = vpop.f32.mrf.mxu0
      %v561 = vadd.f32 0.0, %v560
      %562 = vdwg.mxu0
      %v563 = vmul.f32 %v508, %v447
      %v564 = vmul.f32 %v511, %v448
      %v565 = vmul.f32 %v514, %v449
      %v566 = vmul.f32 %v555, %v447
      %v567 = vmul.f32 %v558, %v448
      %v568 = vmul.f32 %v561, %v449
      %vm569 = vcmask 195584
      %v570 = vsel %vm569, %v563, 0.0
      %571 = vadd.xlane.f32.xlu0 %v570
      %v572 = vpop.xlane.xlu0 %571
      %v573 = vsel %vm569, %v564, 0.0
      %574 = vadd.xlane.f32.xlu0 %v573
      %v575 = vpop.xlane.xlu0 %574
      %v576 = vsel %vm569, %v565, 0.0
      %577 = vadd.xlane.f32.xlu0 %v576
      %v578 = vpop.xlane.xlu0 %577
      %v579 = vsel %vm569, %v566, 0.0
      %580 = vadd.xlane.f32.xlu0 %v579
      %v581 = vpop.xlane.xlu0 %580
      %v582 = vsel %vm569, %v567, 0.0
      %583 = vadd.xlane.f32.xlu0 %v582
      %v584 = vpop.xlane.xlu0 %583
      %v585 = vsel %vm569, %v568, 0.0
      %586 = vadd.xlane.f32.xlu0 %v585
      %v587 = vpop.xlane.xlu0 %586
      %v588 = vsel %vm450, 1, 0
      %vm589 = vcmp.eq.s32.totalorder %v588, 1
      %v590 = vsel %vm589, %v508, -1e+30
      %v591 = vsel %vm589, %v511, -1e+30
      %v592 = vsel %vm589, %v514, -1e+30
      %v593 = vsel %vm589, %v555, -1e+30
      %v594 = vsel %vm589, %v558, -1e+30
      %v595 = vsel %vm589, %v561, -1e+30
      %v596 = vsel %vm569, %v590, -inf
      %597 = vmax.xlane.f32.xlu0 %v596
      %v598 = vpop.xlane.xlu0 %597
      %v599 = vsel %vm569, %v591, -inf
      %600 = vmax.xlane.f32.xlu0 %v599
      %v601 = vpop.xlane.xlu0 %600
      %v602 = vsel %vm569, %v592, -inf
      %603 = vmax.xlane.f32.xlu0 %v602
      %v604 = vpop.xlane.xlu0 %603
      %v605 = vsel %vm569, %v593, -inf
      %606 = vmax.xlane.f32.xlu0 %v605
      %v607 = vpop.xlane.xlu0 %606
      %v608 = vsel %vm569, %v594, -inf
      %609 = vmax.xlane.f32.xlu0 %v608
      %v610 = vpop.xlane.xlu0 %609
      %v611 = vsel %vm569, %v595, -inf
      %612 = vmax.xlane.f32.xlu0 %v611
      %v613 = vpop.xlane.xlu0 %612
      %v614 = vsub.f32 %v590, %v598
      %v615 = vsub.f32 %v591, %v601
      %v616 = vsub.f32 %v592, %v604
      %v617 = vsub.f32 %v593, %v607
      %v618 = vsub.f32 %v594, %v610
      %v619 = vsub.f32 %v595, %v613
      %v620 = vmul.f32 %v614, 1.442695
      %v621 = vpow.pop %v620
      %v622 = vmul.f32 %v615, 1.442695
      %v623 = vpow.pop %v622
      %v624 = vmul.f32 %v616, 1.442695
      %v625 = vpow.pop %v624
      %v626 = vmul.f32 %v617, 1.442695
      %v627 = vpow.pop %v626
      %v628 = vmul.f32 %v618, 1.442695
      %v629 = vpow.pop %v628
      %v630 = vmul.f32 %v619, 1.442695
      %v631 = vpow.pop %v630
      %v632 = vsel %vm569, %v621, 0.0
      %633 = vadd.xlane.f32.xlu0 %v632
      %v634 = vpop.xlane.xlu0 %633
      %v635 = vsel %vm569, %v623, 0.0
      %636 = vadd.xlane.f32.xlu0 %v635
      %v637 = vpop.xlane.xlu0 %636
      %v638 = vsel %vm569, %v625, 0.0
      %639 = vadd.xlane.f32.xlu0 %v638
      %v640 = vpop.xlane.xlu0 %639
      %v641 = vsel %vm569, %v627, 0.0
      %642 = vadd.xlane.f32.xlu0 %v641
      %v643 = vpop.xlane.xlu0 %642
      %v644 = vsel %vm569, %v629, 0.0
      %645 = vadd.xlane.f32.xlu0 %v644
      %v646 = vpop.xlane.xlu0 %645
      %v647 = vsel %vm569, %v631, 0.0
      %648 = vadd.xlane.f32.xlu0 %v647
      %v649 = vpop.xlane.xlu0 %648
      %v650 = vsub.f32 %v572, %v598
      %v651 = vsub.f32 %v575, %v601
      %v652 = vsub.f32 %v578, %v604
      %v653 = vsub.f32 %v581, %v607
      %v654 = vsub.f32 %v584, %v610
      %v655 = vsub.f32 %v587, %v613
      %v656 = vmul.f32 %v650, 1.442695
      %v657 = vpow.pop %v656
      %v658 = vmul.f32 %v651, 1.442695
      %v659 = vpow.pop %v658
      %v660 = vmul.f32 %v652, 1.442695
      %v661 = vpow.pop %v660
      %v662 = vmul.f32 %v653, 1.442695
      %v663 = vpow.pop %v662
      %v664 = vmul.f32 %v654, 1.442695
      %v665 = vpow.pop %v664
      %v666 = vmul.f32 %v655, 1.442695
      %v667 = vpow.pop %v666
      %v668 = vrcp.pop %v634
      %v669 = vmul.f32 %v634, %v668
      %v670 = vsub.f32 1.0, %v669
      %v671 = vmul.f32 %v668, %v670
      %v672 = vadd.f32 %v668, %v671
      %vm673 = vweird.f32 %v634
      %vm674 = vweird.f32 %v668
      %vm675 = vmor %vm673, %vm674
      %v676 = vsel %vm675, %v668, %v672
      %v677 = vand.u32 2147483647, %v634
      %vm678 = vcmp.eq.f32.partialorder %v677, 8.507059e+37
      %v679 = vand.u32 %v634, 2147483648
      %v680 = vor.u32 1.1754944e-38, %v679
      %v681 = vsel %vm678, %v680, %v676
      %v682 = vmul.f32 %v657, %v681
      %v683 = vrcp.pop %v637
      %v684 = vmul.f32 %v637, %v683
      %v685 = vsub.f32 1.0, %v684
      %v686 = vmul.f32 %v683, %v685
      %v687 = vadd.f32 %v683, %v686
      %vm688 = vweird.f32 %v637
      %vm689 = vweird.f32 %v683
      %vm690 = vmor %vm688, %vm689
      %v691 = vsel %vm690, %v683, %v687
      %v692 = vand.u32 2147483647, %v637
      %vm693 = vcmp.eq.f32.partialorder %v692, 8.507059e+37
      %v694 = vand.u32 %v637, 2147483648
      %v695 = vor.u32 1.1754944e-38, %v694
      %v696 = vsel %vm693, %v695, %v691
      %v697 = vmul.f32 %v659, %v696
      %v698 = vrcp.pop %v640
      %v699 = vmul.f32 %v640, %v698
      %v700 = vsub.f32 1.0, %v699
      %v701 = vmul.f32 %v698, %v700
      %v702 = vadd.f32 %v698, %v701
      %vm703 = vweird.f32 %v640
      %vm704 = vweird.f32 %v698
      %vm705 = vmor %vm703, %vm704
      %v706 = vsel %vm705, %v698, %v702
      %v707 = vand.u32 2147483647, %v640
      %vm708 = vcmp.eq.f32.partialorder %v707, 8.507059e+37
      %v709 = vand.u32 %v640, 2147483648
      %v710 = vor.u32 1.1754944e-38, %v709
      %v711 = vsel %vm708, %v710, %v706
      %v712 = vmul.f32 %v661, %v711
      %v713 = vrcp.pop %v643
      %v714 = vmul.f32 %v643, %v713
      %v715 = vsub.f32 1.0, %v714
      %v716 = vmul.f32 %v713, %v715
      %v717 = vadd.f32 %v713, %v716
      %vm718 = vweird.f32 %v643
      %vm719 = vweird.f32 %v713
      %vm720 = vmor %vm718, %vm719
      %v721 = vsel %vm720, %v713, %v717
      %v722 = vand.u32 2147483647, %v643
      %vm723 = vcmp.eq.f32.partialorder %v722, 8.507059e+37
      %v724 = vand.u32 %v643, 2147483648
      %v725 = vor.u32 1.1754944e-38, %v724
      %v726 = vsel %vm723, %v725, %v721
      %v727 = vmul.f32 %v663, %v726
      %v728 = vrcp.pop %v646
      %v729 = vmul.f32 %v646, %v728
      %v730 = vsub.f32 1.0, %v729
      %v731 = vmul.f32 %v728, %v730
      %v732 = vadd.f32 %v728, %v731
      %vm733 = vweird.f32 %v646
      %vm734 = vweird.f32 %v728
      %vm735 = vmor %vm733, %vm734
      %v736 = vsel %vm735, %v728, %v732
      %v737 = vand.u32 2147483647, %v646
      %vm738 = vcmp.eq.f32.partialorder %v737, 8.507059e+37
      %v739 = vand.u32 %v646, 2147483648
      %v740 = vor.u32 1.1754944e-38, %v739
      %v741 = vsel %vm738, %v740, %v736
      %v742 = vmul.f32 %v665, %v741
      %v743 = vrcp.pop %v649
      %v744 = vmul.f32 %v649, %v743
      %v745 = vsub.f32 1.0, %v744
      %v746 = vmul.f32 %v743, %v745
      %v747 = vadd.f32 %v743, %v746
      %vm748 = vweird.f32 %v649
      %vm749 = vweird.f32 %v743
      %vm750 = vmor %vm748, %vm749
      %v751 = vsel %vm750, %v743, %v747
      %v752 = vand.u32 2147483647, %v649
      %vm753 = vcmp.eq.f32.partialorder %v752, 8.507059e+37
      %v754 = vand.u32 %v649, 2147483648
      %v755 = vor.u32 1.1754944e-38, %v754
      %v756 = vsel %vm753, %v755, %v751
      %v757 = vmul.f32 %v667, %v756
      %v758 = vmul.f32 %v682, %v462
      %v759 = vmul.f32 %v697, %v463
      %v760 = vmul.f32 %v712, %v464
      %v761 = vmul.f32 %v727, %v465
      %v762 = vmul.f32 %v742, %v466
      %v763 = vmul.f32 %v757, %v467
      %v764 = vadd.f32 %v758, 0.0
      %v765 = vadd.f32 %v759, 0.0
      %v766 = vadd.f32 %v760, 0.0
      %v767 = vadd.f32 %v761, 0.0
      %v768 = vadd.f32 %v762, 0.0
      %v769 = vadd.f32 %v763, 0.0
      %v770 = vld [vmem:[%s1 + $0x1] sm:$0x1]
      %v771 = vperm.slane %v770, 0
      %v772 = vmul.f32 %v408, %v771
      %v773 = vmul.f32 %v413, %v771
      %v774 = vmul.f32 %v418, %v771
      %v775 = vmul.f32 %v423, %v771
      %v776 = vmul.f32 %v428, %v771
      %v777 = vmul.f32 %v433, %v771
      %s778 = scalar_lea.vmem %s2, 24
      %v779 = vld [vmem:[%s778] sm:$0xff]
      %v780 = vld [vmem:[%s778 + $0x8] sm:$0xff]
      %v781 = vld [vmem:[%s778 + $0x10] sm:$0xff]
      %v782 = vadd.f32 %v772, %v779
      %v783 = vadd.f32 %v773, %v780
      %v784 = vadd.f32 %v774, %v781
      %v785 = vadd.f32 %v775, %v779
      %v786 = vadd.f32 %v776, %v780
      %v787 = vadd.f32 %v777, %v781
      %791 = vrot.lane.b32.xlu0 %v782, 96
      %v792 = vpop.permute.xlu0 %791
      %793 = vrot.lane.b32.xlu0 %v783, 96
      %v794 = vpop.permute.xlu0 %793
      %795 = vrot.lane.b32.xlu0 %v784, 96
      %v796 = vpop.permute.xlu0 %795
      %v797 = vsel %vm477, %v782, 0
      %v799 = vsel %vm477, %v783, 0
      %v801 = vsel %vm477, %v784, 0
      %v803 = vsel %vm477, %v792, 0
      %v805 = vsel %vm477, %v794, 0
      %v807 = vsel %vm477, %v796, 0
      %809 = vmatpush.xpose.msra.mxu0 0.0
      %810 = vmatpush.xpose.msra.mxu0 0.0
      %811 = vmatpush.xpose.msra.mxu0 0.0
      %812 = vmatpush.xpose.msra.mxu0 0.0
      %813 = vmatpush.xpose.msra.mxu0 0.0
      %814 = vmatpush.xpose.msra.mxu0 0.0
      %815 = vmatpush.xpose.msra.mxu0 0.0
      %816 = vmatpush.xpose.msra.mxu0 0.0
      %817 = vmatpush.xpose.msra.mxu0 0.0
      %818 = vmatpush.xpose.msra.mxu0 0.0
      %819 = vmatpush.xpose.msra.mxu0 0.0
      %820 = vmatpush.xpose.msra.mxu0 0.0
      %821 = vmatpush.xpose.msra.mxu0 0.0
      %822 = vmatpush.xpose.msra.mxu0 %v807
      %823 = vmatpush.xpose.msra.mxu0 %v805
      %824 = vmatpush.xpose.msra.mxu0 %v803
      %825 = vmatmul.f32.gmra.mxu0 %v797
      %v826 = vpop.f32.mrf.mxu0
      %v827 = vadd.f32 0.0, %v826
      %828 = vmatmul.f32.gmra.mxu0 %v799
      %v829 = vpop.f32.mrf.mxu0
      %v830 = vadd.f32 0.0, %v829
      %831 = vmatmul.f32.gmra.mxu0 %v801
      %v832 = vpop.f32.mrf.mxu0
      %v833 = vadd.f32 0.0, %v832
      %834 = vdwg.mxu0
      %838 = vrot.lane.b32.xlu0 %v785, 96
      %v839 = vpop.permute.xlu0 %838
      %840 = vrot.lane.b32.xlu0 %v786, 96
      %v841 = vpop.permute.xlu0 %840
      %842 = vrot.lane.b32.xlu0 %v787, 96
      %v843 = vpop.permute.xlu0 %842
      %v844 = vsel %vm477, %v785, 0
      %v846 = vsel %vm477, %v786, 0
      %v848 = vsel %vm477, %v787, 0
      %v850 = vsel %vm477, %v839, 0
      %v852 = vsel %vm477, %v841, 0
      %v854 = vsel %vm477, %v843, 0
      %856 = vmatpush.xpose.msra.mxu0 0.0
      %857 = vmatpush.xpose.msra.mxu0 0.0
      %858 = vmatpush.xpose.msra.mxu0 0.0
      %859 = vmatpush.xpose.msra.mxu0 0.0
      %860 = vmatpush.xpose.msra.mxu0 0.0
      %861 = vmatpush.xpose.msra.mxu0 0.0
      %862 = vmatpush.xpose.msra.mxu0 0.0
      %863 = vmatpush.xpose.msra.mxu0 0.0
      %864 = vmatpush.xpose.msra.mxu0 0.0
      %865 = vmatpush.xpose.msra.mxu0 0.0
      %866 = vmatpush.xpose.msra.mxu0 0.0
      %867 = vmatpush.xpose.msra.mxu0 0.0
      %868 = vmatpush.xpose.msra.mxu0 0.0
      %869 = vmatpush.xpose.msra.mxu0 %v854
      %870 = vmatpush.xpose.msra.mxu0 %v852
      %871 = vmatpush.xpose.msra.mxu0 %v850
      %872 = vmatmul.f32.gmra.mxu0 %v844
      %v873 = vpop.f32.mrf.mxu0
      %v874 = vadd.f32 0.0, %v873
      %875 = vmatmul.f32.gmra.mxu0 %v846
      %v876 = vpop.f32.mrf.mxu0
      %v877 = vadd.f32 0.0, %v876
      %878 = vmatmul.f32.gmra.mxu0 %v848
      %v879 = vpop.f32.mrf.mxu0
      %v880 = vadd.f32 0.0, %v879
      %881 = vdwg.mxu0
      %v882 = vmul.f32 %v827, %v447
      %v883 = vmul.f32 %v830, %v448
      %v884 = vmul.f32 %v833, %v449
      %v885 = vmul.f32 %v874, %v447
      %v886 = vmul.f32 %v877, %v448
      %v887 = vmul.f32 %v880, %v449
      %v888 = vsel %vm569, %v882, 0.0
      %889 = vadd.xlane.f32.xlu0 %v888
      %v890 = vpop.xlane.xlu0 %889
      %v891 = vsel %vm569, %v883, 0.0
      %892 = vadd.xlane.f32.xlu0 %v891
      %v893 = vpop.xlane.xlu0 %892
      %v894 = vsel %vm569, %v884, 0.0
      %895 = vadd.xlane.f32.xlu0 %v894
      %v896 = vpop.xlane.xlu0 %895
      %v897 = vsel %vm569, %v885, 0.0
      %898 = vadd.xlane.f32.xlu0 %v897
      %v899 = vpop.xlane.xlu0 %898
      %v900 = vsel %vm569, %v886, 0.0
      %901 = vadd.xlane.f32.xlu0 %v900
      %v902 = vpop.xlane.xlu0 %901
      %v903 = vsel %vm569, %v887, 0.0
      %904 = vadd.xlane.f32.xlu0 %v903
      %v905 = vpop.xlane.xlu0 %904
      %v906 = vsel %vm589, %v827, -1e+30
      %v907 = vsel %vm589, %v830, -1e+30
      %v908 = vsel %vm589, %v833, -1e+30
      %v909 = vsel %vm589, %v874, -1e+30
      %v910 = vsel %vm589, %v877, -1e+30
      %v911 = vsel %vm589, %v880, -1e+30
      %v912 = vsel %vm569, %v906, -inf
      %913 = vmax.xlane.f32.xlu0 %v912
      %v914 = vpop.xlane.xlu0 %913
      %v915 = vsel %vm569, %v907, -inf
      %916 = vmax.xlane.f32.xlu0 %v915
      %v917 = vpop.xlane.xlu0 %916
      %v918 = vsel %vm569, %v908, -inf
      %919 = vmax.xlane.f32.xlu0 %v918
      %v920 = vpop.xlane.xlu0 %919
      %v921 = vsel %vm569, %v909, -inf
      %922 = vmax.xlane.f32.xlu0 %v921
      %v923 = vpop.xlane.xlu0 %922
      %v924 = vsel %vm569, %v910, -inf
      %925 = vmax.xlane.f32.xlu0 %v924
      %v926 = vpop.xlane.xlu0 %925
      %v927 = vsel %vm569, %v911, -inf
      %928 = vmax.xlane.f32.xlu0 %v927
      %v929 = vpop.xlane.xlu0 %928
      %v930 = vsub.f32 %v906, %v914
      %v931 = vsub.f32 %v907, %v917
      %v932 = vsub.f32 %v908, %v920
      %v933 = vsub.f32 %v909, %v923
      %v934 = vsub.f32 %v910, %v926
      %v935 = vsub.f32 %v911, %v929
      %v936 = vmul.f32 %v930, 1.442695
      %v937 = vpow.pop %v936
      %v938 = vmul.f32 %v931, 1.442695
      %v939 = vpow.pop %v938
      %v940 = vmul.f32 %v932, 1.442695
      %v941 = vpow.pop %v940
      %v942 = vmul.f32 %v933, 1.442695
      %v943 = vpow.pop %v942
      %v944 = vmul.f32 %v934, 1.442695
      %v945 = vpow.pop %v944
      %v946 = vmul.f32 %v935, 1.442695
      %v947 = vpow.pop %v946
      %v948 = vsel %vm569, %v937, 0.0
      %949 = vadd.xlane.f32.xlu0 %v948
      %v950 = vpop.xlane.xlu0 %949
      %v951 = vsel %vm569, %v939, 0.0
      %952 = vadd.xlane.f32.xlu0 %v951
      %v953 = vpop.xlane.xlu0 %952
      %v954 = vsel %vm569, %v941, 0.0
      %955 = vadd.xlane.f32.xlu0 %v954
      %v956 = vpop.xlane.xlu0 %955
      %v957 = vsel %vm569, %v943, 0.0
      %958 = vadd.xlane.f32.xlu0 %v957
      %v959 = vpop.xlane.xlu0 %958
      %v960 = vsel %vm569, %v945, 0.0
      %961 = vadd.xlane.f32.xlu0 %v960
      %v962 = vpop.xlane.xlu0 %961
      %v963 = vsel %vm569, %v947, 0.0
      %964 = vadd.xlane.f32.xlu0 %v963
      %v965 = vpop.xlane.xlu0 %964
      %v966 = vsub.f32 %v890, %v914
      %v967 = vsub.f32 %v893, %v917
      %v968 = vsub.f32 %v896, %v920
      %v969 = vsub.f32 %v899, %v923
      %v970 = vsub.f32 %v902, %v926
      %v971 = vsub.f32 %v905, %v929
      %v972 = vmul.f32 %v966, 1.442695
      %v973 = vpow.pop %v972
      %v974 = vmul.f32 %v967, 1.442695
      %v975 = vpow.pop %v974
      %v976 = vmul.f32 %v968, 1.442695
      %v977 = vpow.pop %v976
      %v978 = vmul.f32 %v969, 1.442695
      %v979 = vpow.pop %v978
      %v980 = vmul.f32 %v970, 1.442695
      %v981 = vpow.pop %v980
      %v982 = vmul.f32 %v971, 1.442695
      %v983 = vpow.pop %v982
      %v984 = vrcp.pop %v950
      %v985 = vmul.f32 %v950, %v984
      %v986 = vsub.f32 1.0, %v985
      %v987 = vmul.f32 %v984, %v986
      %v988 = vadd.f32 %v984, %v987
      %vm989 = vweird.f32 %v950
      %vm990 = vweird.f32 %v984
      %vm991 = vmor %vm989, %vm990
      %v992 = vsel %vm991, %v984, %v988
      %v993 = vand.u32 2147483647, %v950
      %vm994 = vcmp.eq.f32.partialorder %v993, 8.507059e+37
      %v995 = vand.u32 %v950, 2147483648
      %v996 = vor.u32 1.1754944e-38, %v995
      %v997 = vsel %vm994, %v996, %v992
      %v998 = vmul.f32 %v973, %v997
      %v999 = vrcp.pop %v953
      %v1000 = vmul.f32 %v953, %v999
      %v1001 = vsub.f32 1.0, %v1000
      %v1002 = vmul.f32 %v999, %v1001
      %v1003 = vadd.f32 %v999, %v1002
      %vm1004 = vweird.f32 %v953
      %vm1005 = vweird.f32 %v999
      %vm1006 = vmor %vm1004, %vm1005
      %v1007 = vsel %vm1006, %v999, %v1003
      %v1008 = vand.u32 2147483647, %v953
      %vm1009 = vcmp.eq.f32.partialorder %v1008, 8.507059e+37
      %v1010 = vand.u32 %v953, 2147483648
      %v1011 = vor.u32 1.1754944e-38, %v1010
      %v1012 = vsel %vm1009, %v1011, %v1007
      %v1013 = vmul.f32 %v975, %v1012
      %v1014 = vrcp.pop %v956
      %v1015 = vmul.f32 %v956, %v1014
      %v1016 = vsub.f32 1.0, %v1015
      %v1017 = vmul.f32 %v1014, %v1016
      %v1018 = vadd.f32 %v1014, %v1017
      %vm1019 = vweird.f32 %v956
      %vm1020 = vweird.f32 %v1014
      %vm1021 = vmor %vm1019, %vm1020
      %v1022 = vsel %vm1021, %v1014, %v1018
      %v1023 = vand.u32 2147483647, %v956
      %vm1024 = vcmp.eq.f32.partialorder %v1023, 8.507059e+37
      %v1025 = vand.u32 %v956, 2147483648
      %v1026 = vor.u32 1.1754944e-38, %v1025
      %v1027 = vsel %vm1024, %v1026, %v1022
      %v1028 = vmul.f32 %v977, %v1027
      %v1029 = vrcp.pop %v959
      %v1030 = vmul.f32 %v959, %v1029
      %v1031 = vsub.f32 1.0, %v1030
      %v1032 = vmul.f32 %v1029, %v1031
      %v1033 = vadd.f32 %v1029, %v1032
      %vm1034 = vweird.f32 %v959
      %vm1035 = vweird.f32 %v1029
      %vm1036 = vmor %vm1034, %vm1035
      %v1037 = vsel %vm1036, %v1029, %v1033
      %v1038 = vand.u32 2147483647, %v959
      %vm1039 = vcmp.eq.f32.partialorder %v1038, 8.507059e+37
      %v1040 = vand.u32 %v959, 2147483648
      %v1041 = vor.u32 1.1754944e-38, %v1040
      %v1042 = vsel %vm1039, %v1041, %v1037
      %v1043 = vmul.f32 %v979, %v1042
      %v1044 = vrcp.pop %v962
      %v1045 = vmul.f32 %v962, %v1044
      %v1046 = vsub.f32 1.0, %v1045
      %v1047 = vmul.f32 %v1044, %v1046
      %v1048 = vadd.f32 %v1044, %v1047
      %vm1049 = vweird.f32 %v962
      %vm1050 = vweird.f32 %v1044
      %vm1051 = vmor %vm1049, %vm1050
      %v1052 = vsel %vm1051, %v1044, %v1048
      %v1053 = vand.u32 2147483647, %v962
      %vm1054 = vcmp.eq.f32.partialorder %v1053, 8.507059e+37
      %v1055 = vand.u32 %v962, 2147483648
      %v1056 = vor.u32 1.1754944e-38, %v1055
      %v1057 = vsel %vm1054, %v1056, %v1052
      %v1058 = vmul.f32 %v981, %v1057
      %v1059 = vrcp.pop %v965
      %v1060 = vmul.f32 %v965, %v1059
      %v1061 = vsub.f32 1.0, %v1060
      %v1062 = vmul.f32 %v1059, %v1061
      %v1063 = vadd.f32 %v1059, %v1062
      %vm1064 = vweird.f32 %v965
      %vm1065 = vweird.f32 %v1059
      %vm1066 = vmor %vm1064, %vm1065
      %v1067 = vsel %vm1066, %v1059, %v1063
      %v1068 = vand.u32 2147483647, %v965
      %vm1069 = vcmp.eq.f32.partialorder %v1068, 8.507059e+37
      %v1070 = vand.u32 %v965, 2147483648
      %v1071 = vor.u32 1.1754944e-38, %v1070
      %v1072 = vsel %vm1069, %v1071, %v1067
      %v1073 = vmul.f32 %v983, %v1072
      %v1074 = vmul.f32 %v998, %v782
      %v1075 = vmul.f32 %v1013, %v783
      %v1076 = vmul.f32 %v1028, %v784
      %v1077 = vmul.f32 %v1043, %v785
      %v1078 = vmul.f32 %v1058, %v786
      %v1079 = vmul.f32 %v1073, %v787
      %v1080 = vadd.f32 %v764, %v1074
      %v1081 = vadd.f32 %v765, %v1075
      %v1082 = vadd.f32 %v766, %v1076
      %v1083 = vadd.f32 %v767, %v1077
      %v1084 = vadd.f32 %v768, %v1078
      %v1085 = vadd.f32 %v769, %v1079
      %v1086 = vperm.slane %v396, 5
      %v1087 = vmul.f32 %v408, %v1086
      %v1088 = vmul.f32 %v413, %v1086
      %v1089 = vmul.f32 %v418, %v1086
      %v1090 = vmul.f32 %v423, %v1086
      %v1091 = vmul.f32 %v428, %v1086
      %v1092 = vmul.f32 %v433, %v1086
      %v1093 = vld [vmem:[%s3] sm:$0xff]
      %v1094 = vld [vmem:[%s3 + $0x8] sm:$0xff]
      %v1095 = vld [vmem:[%s3 + $0x10] sm:$0xff]
      %v1096 = vadd.f32 %v1087, %v1093
      %v1097 = vadd.f32 %v1088, %v1094
      %v1098 = vadd.f32 %v1089, %v1095
      %v1099 = vadd.f32 %v1090, %v1093
      %v1100 = vadd.f32 %v1091, %v1094
      %v1101 = vadd.f32 %v1092, %v1095
      %v1102 = vpack.c.bf16 %v1081, %v1080
      %v1103 = vpack.c.bf16 %v1083, %v1082
      %v1104 = vpack.c.bf16 %v1085, %v1084
      %v1105 = vld [vmem:[%s4] sm:$0xf]
      %v1106 = vld [vmem:[%s4 + $0x4] sm:$0xf]
      %v1107 = vld [vmem:[%s4 + $0x8] sm:$0xf]
      %v1108 = vld [vmem:[%s4 + $0xc] sm:$0xf]
      %1112 = vrot.lane.b32.xlu0 %v1102, 64
      %v1113 = vpop.permute.xlu0 %1112
      %1114 = vrot.lane.b32.xlu0 %v1103, 64
      %v1115 = vpop.permute.xlu0 %1114
      %1116 = vrot.lane.b32.xlu0 %v1104, 64
      %v1117 = vpop.permute.xlu0 %1116
      %v1122 = vunpack.c.l.b16 %v1105
      %v1123 = vunpack.c.l.b16 %v1106
      %v1124 = vunpack.c.l.b16 %v1107
      %v1125 = vunpack.c.l.b16 %v1108
      %v1126 = vpack.c.b16 %v1123, %v1122
      %v1127 = vpack.c.b16 %v1125, %v1124
      %v1131 = vsel %vm477, %v1113, 0
      %v1134 = vsel %vm477, %v1115, 0
      %v1137 = vsel %vm477, %v1117, 0
      %1139 = vmatpush.bf16.msra.mxu0 0
      %1140 = vmatpush.bf16.msra.mxu0 0
      %1141 = vmatpush.bf16.msra.mxu0 0
      %1142 = vmatpush.bf16.msra.mxu0 0
      %1143 = vmatpush.bf16.msra.mxu0 0
      %1144 = vmatpush.bf16.msra.mxu0 0
      %1145 = vmatpush.bf16.msra.mxu0 %v1127
      %1146 = vmatpush.bf16.msra.mxu0 %v1126
      %1147 = vmatmul.bf16.gmra.mxu0 %v1131
      %v1148 = vpop.f32.mrf.mxu0
      %v1149 = vadd.f32 0.0, %v1148
      %v1150 = vpop.f32.mrf.mxu0
      %v1151 = vadd.f32 0.0, %v1150
      %1152 = vmatmul.bf16.gmra.mxu0 %v1134
      %v1153 = vpop.f32.mrf.mxu0
      %v1154 = vadd.f32 0.0, %v1153
      %v1155 = vpop.f32.mrf.mxu0
      %v1156 = vadd.f32 0.0, %v1155
      %1157 = vmatmul.bf16.gmra.mxu0 %v1137
      %v1158 = vpop.f32.mrf.mxu0
      %v1159 = vadd.f32 0.0, %v1158
      %v1160 = vpop.f32.mrf.mxu0
      %v1161 = vadd.f32 0.0, %v1160
      %1162 = vdwg.mxu0
      %v1163 = vadd.f32 %v1096, %v1149
      %v1164 = vadd.f32 %v1097, %v1151
      %v1165 = vadd.f32 %v1098, %v1154
      %v1166 = vadd.f32 %v1099, %v1156
      %v1167 = vadd.f32 %v1100, %v1159
      %v1168 = vadd.f32 %v1101, %v1161
      %v1169 = vsel %vm477, %v1163, 0.0
      %1170 = vadd.xlane.f32.xlu0 %v1169
      %v1171 = vpop.xlane.xlu0 %1170
      %v1172 = vsel %vm477, %v1164, 0.0
      %1173 = vadd.xlane.f32.xlu0 %v1172
      %v1174 = vpop.xlane.xlu0 %1173
      %v1175 = vsel %vm477, %v1165, 0.0
      %1176 = vadd.xlane.f32.xlu0 %v1175
      %v1177 = vpop.xlane.xlu0 %1176
      %v1178 = vsel %vm477, %v1166, 0.0
      %1179 = vadd.xlane.f32.xlu0 %v1178
      %v1180 = vpop.xlane.xlu0 %1179
      %v1181 = vsel %vm477, %v1167, 0.0
      %1182 = vadd.xlane.f32.xlu0 %v1181
      %v1183 = vpop.xlane.xlu0 %1182
      %v1184 = vsel %vm477, %v1168, 0.0
      %1185 = vadd.xlane.f32.xlu0 %v1184
      %v1186 = vpop.xlane.xlu0 %1185
      %v1187 = vrcp.pop 32.0
      %v1188 = vmul.f32 32.0, %v1187
      %v1189 = vsub.f32 1.0, %v1188
      %v1190 = vmul.f32 %v1187, %v1189
      %v1191 = vadd.f32 %v1187, %v1190
      %vm1192 = vweird.f32 %v1187
      %v1193 = vsel %vm1192, %v1187, %v1191
      %v1194 = vmul.f32 %v1171, %v1193
      %v1195 = vmul.f32 %v1174, %v1193
      %v1196 = vmul.f32 %v1177, %v1193
      %v1197 = vmul.f32 %v1180, %v1193
      %v1198 = vmul.f32 %v1183, %v1193
      %v1199 = vmul.f32 %v1186, %v1193
      %v1200 = vmul.f32 %v1163, %v1163
      %v1201 = vmul.f32 %v1164, %v1164
      %v1202 = vmul.f32 %v1165, %v1165
      %v1203 = vmul.f32 %v1166, %v1166
      %v1204 = vmul.f32 %v1167, %v1167
      %v1205 = vmul.f32 %v1168, %v1168
      %v1206 = vsel %vm477, %v1200, 0.0
      %1207 = vadd.xlane.f32.xlu0 %v1206
      %v1208 = vpop.xlane.xlu0 %1207
      %v1209 = vsel %vm477, %v1201, 0.0
      %1210 = vadd.xlane.f32.xlu0 %v1209
      %v1211 = vpop.xlane.xlu0 %1210
      %v1212 = vsel %vm477, %v1202, 0.0
      %1213 = vadd.xlane.f32.xlu0 %v1212
      %v1214 = vpop.xlane.xlu0 %1213
      %v1215 = vsel %vm477, %v1203, 0.0
      %1216 = vadd.xlane.f32.xlu0 %v1215
      %v1217 = vpop.xlane.xlu0 %1216
      %v1218 = vsel %vm477, %v1204, 0.0
      %1219 = vadd.xlane.f32.xlu0 %v1218
      %v1220 = vpop.xlane.xlu0 %1219
      %v1221 = vsel %vm477, %v1205, 0.0
      %1222 = vadd.xlane.f32.xlu0 %v1221
      %v1223 = vpop.xlane.xlu0 %1222
      %v1224 = vmul.f32 %v1208, %v1193
      %v1225 = vmul.f32 %v1211, %v1193
      %v1226 = vmul.f32 %v1214, %v1193
      %v1227 = vmul.f32 %v1217, %v1193
      %v1228 = vmul.f32 %v1220, %v1193
      %v1229 = vmul.f32 %v1223, %v1193
      %v1230 = vmul.f32 %v1194, %v1194
      %v1231 = vmul.f32 %v1195, %v1195
      %v1232 = vmul.f32 %v1196, %v1196
      %v1233 = vmul.f32 %v1197, %v1197
      %v1234 = vmul.f32 %v1198, %v1198
      %v1235 = vmul.f32 %v1199, %v1199
      %v1236 = vsub.f32 %v1224, %v1230
      %v1237 = vsub.f32 %v1225, %v1231
      %v1238 = vsub.f32 %v1226, %v1232
      %v1239 = vsub.f32 %v1227, %v1233
      %v1240 = vsub.f32 %v1228, %v1234
      %v1241 = vsub.f32 %v1229, %v1235
      %v1242 = vmax.f32 %v1236, 0.0
      %v1243 = vmax.f32 %v1237, 0.0
      %v1244 = vmax.f32 %v1238, 0.0
      %v1245 = vmax.f32 %v1239, 0.0
      %v1246 = vmax.f32 %v1240, 0.0
      %v1247 = vmax.f32 %v1241, 0.0
      %v1248 = vsub.f32 %v1163, %v1194
      %v1249 = vsub.f32 %v1164, %v1195
      %v1250 = vsub.f32 %v1165, %v1196
      %v1251 = vsub.f32 %v1166, %v1197
      %v1252 = vsub.f32 %v1167, %v1198
      %v1253 = vsub.f32 %v1168, %v1199
      %v1254 = vadd.f32 %v1242, 1e-05
      %v1255 = vadd.f32 %v1243, 1e-05
      %v1256 = vadd.f32 %v1244, 1e-05
      %v1257 = vadd.f32 %v1245, 1e-05
      %v1258 = vadd.f32 %v1246, 1e-05
      %v1259 = vadd.f32 %v1247, 1e-05
      %v1260 = vrsqrt.pop %v1254
      %v1261 = vmul.f32 %v1260, %v1254
      %v1262 = vmul.f32 %v1261, %v1260
      %v1263 = vmul.f32 0.5, %v1262
      %v1264 = vsub.f32 1.5, %v1263
      %v1265 = vmul.f32 %v1260, %v1264
      %vm1266 = vweird.f32 %v1254
      %vm1267 = vweird.f32 %v1260
      %vm1268 = vmor %vm1266, %vm1267
      %v1269 = vsel %vm1268, %v1260, %v1265
      %v1270 = vrsqrt.pop %v1255
      %v1271 = vmul.f32 %v1270, %v1255
      %v1272 = vmul.f32 %v1271, %v1270
      %v1273 = vmul.f32 0.5, %v1272
      %v1274 = vsub.f32 1.5, %v1273
      %v1275 = vmul.f32 %v1270, %v1274
      %vm1276 = vweird.f32 %v1255
      %vm1277 = vweird.f32 %v1270
      %vm1278 = vmor %vm1276, %vm1277
      %v1279 = vsel %vm1278, %v1270, %v1275
      %v1280 = vrsqrt.pop %v1256
      %v1281 = vmul.f32 %v1280, %v1256
      %v1282 = vmul.f32 %v1281, %v1280
      %v1283 = vmul.f32 0.5, %v1282
      %v1284 = vsub.f32 1.5, %v1283
      %v1285 = vmul.f32 %v1280, %v1284
      %vm1286 = vweird.f32 %v1256
      %vm1287 = vweird.f32 %v1280
      %vm1288 = vmor %vm1286, %vm1287
      %v1289 = vsel %vm1288, %v1280, %v1285
      %v1290 = vrsqrt.pop %v1257
      %v1291 = vmul.f32 %v1290, %v1257
      %v1292 = vmul.f32 %v1291, %v1290
      %v1293 = vmul.f32 0.5, %v1292
      %v1294 = vsub.f32 1.5, %v1293
      %v1295 = vmul.f32 %v1290, %v1294
      %vm1296 = vweird.f32 %v1257
      %vm1297 = vweird.f32 %v1290
      %vm1298 = vmor %vm1296, %vm1297
      %v1299 = vsel %vm1298, %v1290, %v1295
      %v1300 = vrsqrt.pop %v1258
      %v1301 = vmul.f32 %v1300, %v1258
      %v1302 = vmul.f32 %v1301, %v1300
      %v1303 = vmul.f32 0.5, %v1302
      %v1304 = vsub.f32 1.5, %v1303
      %v1305 = vmul.f32 %v1300, %v1304
      %vm1306 = vweird.f32 %v1258
      %vm1307 = vweird.f32 %v1300
      %vm1308 = vmor %vm1306, %vm1307
      %v1309 = vsel %vm1308, %v1300, %v1305
      %v1310 = vrsqrt.pop %v1259
      %v1311 = vmul.f32 %v1310, %v1259
      %v1312 = vmul.f32 %v1311, %v1310
      %v1313 = vmul.f32 0.5, %v1312
      %v1314 = vsub.f32 1.5, %v1313
      %v1315 = vmul.f32 %v1310, %v1314
      %vm1316 = vweird.f32 %v1259
      %vm1317 = vweird.f32 %v1310
      %vm1318 = vmor %vm1316, %vm1317
      %v1319 = vsel %vm1318, %v1310, %v1315
      %v1320 = vmul.f32 %v1248, %v1269
      %v1321 = vmul.f32 %v1249, %v1279
      %v1322 = vmul.f32 %v1250, %v1289
      %v1323 = vmul.f32 %v1251, %v1299
      %v1324 = vmul.f32 %v1252, %v1309
      %v1325 = vmul.f32 %v1253, %v1319
      %v1326 = vperm.slane %v396, 0
      %v1327 = vmul.f32 %v1320, %v1326
      %v1328 = vmul.f32 %v1321, %v1326
      %v1329 = vmul.f32 %v1322, %v1326
      %v1330 = vmul.f32 %v1323, %v1326
      %v1331 = vmul.f32 %v1324, %v1326
      %v1332 = vmul.f32 %v1325, %v1326
      %v1333 = vperm.slane %v396, 1
      %v1334 = vadd.f32 %v1327, %v1333
      %v1335 = vadd.f32 %v1328, %v1333
      %v1336 = vadd.f32 %v1329, %v1333
      %v1337 = vadd.f32 %v1330, %v1333
      %v1338 = vadd.f32 %v1331, %v1333
      %v1339 = vadd.f32 %v1332, %v1333
      %v1340 = vpack.c.bf16 %v1335, %v1334
      %v1341 = vpack.c.bf16 %v1337, %v1336
      %v1342 = vpack.c.bf16 %v1339, %v1338
      %v1343 = vld [vmem:[%s6] sm:$0xf]
      %v1344 = vld [vmem:[%s6 + $0x4] sm:$0xf]
      %v1345 = vld [vmem:[%s6 + $0x8] sm:$0xf]
      %v1346 = vld [vmem:[%s6 + $0xc] sm:$0xf]
      %v1347 = vperm.slane %v397, 0
      %v1352 = vunpack.c.l.b16 %v1343
      %v1353 = vunpack.c.l.b16 %v1344
      %v1354 = vunpack.c.l.b16 %v1345
      %v1355 = vunpack.c.l.b16 %v1346
      %v1356 = vpack.c.b16 %v1353, %v1352
      %v1357 = vpack.c.b16 %v1355, %v1354
      %v1361 = vsel %vm477, %v1340, 0
      %v1364 = vsel %vm477, %v1341, 0
      %v1367 = vsel %vm477, %v1342, 0
      %1369 = vmatpush.bf16.msra.mxu0 0
      %1370 = vmatpush.bf16.msra.mxu0 0
      %1371 = vmatpush.bf16.msra.mxu0 0
      %1372 = vmatpush.bf16.msra.mxu0 0
      %1373 = vmatpush.bf16.msra.mxu0 0
      %1374 = vmatpush.bf16.msra.mxu0 0
      %1375 = vmatpush.bf16.msra.mxu0 %v1357
      %1376 = vmatpush.bf16.msra.mxu0 %v1356
      %1377 = vmatmul.bf16.gmra.mxu0 %v1361
      %v1378 = vpop.f32.mrf.mxu0
      %v1379 = vadd.f32 %v1347, %v1378
      %v1380 = vpop.f32.mrf.mxu0
      %v1381 = vadd.f32 %v1347, %v1380
      %1382 = vmatmul.bf16.gmra.mxu0 %v1364
      %v1383 = vpop.f32.mrf.mxu0
      %v1384 = vadd.f32 %v1347, %v1383
      %v1385 = vpop.f32.mrf.mxu0
      %v1386 = vadd.f32 %v1347, %v1385
      %1387 = vmatmul.bf16.gmra.mxu0 %v1367
      %v1388 = vpop.f32.mrf.mxu0
      %v1389 = vadd.f32 %v1347, %v1388
      %v1390 = vpop.f32.mrf.mxu0
      %v1391 = vadd.f32 %v1347, %v1390
      %1392 = vdwg.mxu0
      %vm1393 = vcmask 523264
      %v1394 = vsel %vm1393, %v1379, 0.0
      %1395 = vadd.xlane.f32.xlu0 %v1394
      %v1396 = vpop.xlane.xlu0 %1395
      %v1397 = vsel %vm1393, %v1381, 0.0
      %1398 = vadd.xlane.f32.xlu0 %v1397
      %v1399 = vpop.xlane.xlu0 %1398
      %v1400 = vsel %vm1393, %v1384, 0.0
      %1401 = vadd.xlane.f32.xlu0 %v1400
      %v1402 = vpop.xlane.xlu0 %1401
      %v1403 = vsel %vm1393, %v1386, 0.0
      %1404 = vadd.xlane.f32.xlu0 %v1403
      %v1405 = vpop.xlane.xlu0 %1404
      %v1406 = vsel %vm1393, %v1389, 0.0
      %1407 = vadd.xlane.f32.xlu0 %v1406
      %v1408 = vpop.xlane.xlu0 %1407
      %v1409 = vsel %vm1393, %v1391, 0.0
      %1410 = vadd.xlane.f32.xlu0 %v1409
      %v1411 = vpop.xlane.xlu0 %1410
      %v1412 = vrcp.pop 64.0
      %v1413 = vmul.f32 64.0, %v1412
      %v1414 = vsub.f32 1.0, %v1413
      %v1415 = vmul.f32 %v1412, %v1414
      %v1416 = vadd.f32 %v1412, %v1415
      %vm1417 = vweird.f32 %v1412
      %v1418 = vsel %vm1417, %v1412, %v1416
      %v1419 = vmul.f32 %v1396, %v1418
      %v1420 = vmul.f32 %v1399, %v1418
      %v1421 = vmul.f32 %v1402, %v1418
      %v1422 = vmul.f32 %v1405, %v1418
      %v1423 = vmul.f32 %v1408, %v1418
      %v1424 = vmul.f32 %v1411, %v1418
      %v1425 = vmul.f32 %v1379, %v1379
      %v1426 = vmul.f32 %v1381, %v1381
      %v1427 = vmul.f32 %v1384, %v1384
      %v1428 = vmul.f32 %v1386, %v1386
      %v1429 = vmul.f32 %v1389, %v1389
      %v1430 = vmul.f32 %v1391, %v1391
      %v1431 = vsel %vm1393, %v1425, 0.0
      %1432 = vadd.xlane.f32.xlu0 %v1431
      %v1433 = vpop.xlane.xlu0 %1432
      %v1434 = vsel %vm1393, %v1426, 0.0
      %1435 = vadd.xlane.f32.xlu0 %v1434
      %v1436 = vpop.xlane.xlu0 %1435
      %v1437 = vsel %vm1393, %v1427, 0.0
      %1438 = vadd.xlane.f32.xlu0 %v1437
      %v1439 = vpop.xlane.xlu0 %1438
      %v1440 = vsel %vm1393, %v1428, 0.0
      %1441 = vadd.xlane.f32.xlu0 %v1440
      %v1442 = vpop.xlane.xlu0 %1441
      %v1443 = vsel %vm1393, %v1429, 0.0
      %1444 = vadd.xlane.f32.xlu0 %v1443
      %v1445 = vpop.xlane.xlu0 %1444
      %v1446 = vsel %vm1393, %v1430, 0.0
      %1447 = vadd.xlane.f32.xlu0 %v1446
      %v1448 = vpop.xlane.xlu0 %1447
      %v1449 = vmul.f32 %v1433, %v1418
      %v1450 = vmul.f32 %v1436, %v1418
      %v1451 = vmul.f32 %v1439, %v1418
      %v1452 = vmul.f32 %v1442, %v1418
      %v1453 = vmul.f32 %v1445, %v1418
      %v1454 = vmul.f32 %v1448, %v1418
      %v1455 = vmul.f32 %v1419, %v1419
      %v1456 = vmul.f32 %v1420, %v1420
      %v1457 = vmul.f32 %v1421, %v1421
      %v1458 = vmul.f32 %v1422, %v1422
      %v1459 = vmul.f32 %v1423, %v1423
      %v1460 = vmul.f32 %v1424, %v1424
      %v1461 = vsub.f32 %v1449, %v1455
      %v1462 = vsub.f32 %v1450, %v1456
      %v1463 = vsub.f32 %v1451, %v1457
      %v1464 = vsub.f32 %v1452, %v1458
      %v1465 = vsub.f32 %v1453, %v1459
      %v1466 = vsub.f32 %v1454, %v1460
      %v1467 = vmax.f32 %v1461, 0.0
      %v1468 = vmax.f32 %v1462, 0.0
      %v1469 = vmax.f32 %v1463, 0.0
      %v1470 = vmax.f32 %v1464, 0.0
      %v1471 = vmax.f32 %v1465, 0.0
      %v1472 = vmax.f32 %v1466, 0.0
      %v1473 = vsub.f32 %v1379, %v1419
      %v1474 = vsub.f32 %v1381, %v1420
      %v1475 = vsub.f32 %v1384, %v1421
      %v1476 = vsub.f32 %v1386, %v1422
      %v1477 = vsub.f32 %v1389, %v1423
      %v1478 = vsub.f32 %v1391, %v1424
      %v1479 = vadd.f32 %v1467, 1e-05
      %v1480 = vadd.f32 %v1468, 1e-05
      %v1481 = vadd.f32 %v1469, 1e-05
      %v1482 = vadd.f32 %v1470, 1e-05
      %v1483 = vadd.f32 %v1471, 1e-05
      %v1484 = vadd.f32 %v1472, 1e-05
      %v1485 = vrsqrt.pop %v1479
      %v1486 = vmul.f32 %v1485, %v1479
      %v1487 = vmul.f32 %v1486, %v1485
      %v1488 = vmul.f32 0.5, %v1487
      %v1489 = vsub.f32 1.5, %v1488
      %v1490 = vmul.f32 %v1485, %v1489
      %vm1491 = vweird.f32 %v1479
      %vm1492 = vweird.f32 %v1485
      %vm1493 = vmor %vm1491, %vm1492
      %v1494 = vsel %vm1493, %v1485, %v1490
      %v1495 = vrsqrt.pop %v1480
      %v1496 = vmul.f32 %v1495, %v1480
      %v1497 = vmul.f32 %v1496, %v1495
      %v1498 = vmul.f32 0.5, %v1497
      %v1499 = vsub.f32 1.5, %v1498
      %v1500 = vmul.f32 %v1495, %v1499
      %vm1501 = vweird.f32 %v1480
      %vm1502 = vweird.f32 %v1495
      %vm1503 = vmor %vm1501, %vm1502
      %v1504 = vsel %vm1503, %v1495, %v1500
      %v1505 = vrsqrt.pop %v1481
      %v1506 = vmul.f32 %v1505, %v1481
      %v1507 = vmul.f32 %v1506, %v1505
      %v1508 = vmul.f32 0.5, %v1507
      %v1509 = vsub.f32 1.5, %v1508
      %v1510 = vmul.f32 %v1505, %v1509
      %vm1511 = vweird.f32 %v1481
      %vm1512 = vweird.f32 %v1505
      %vm1513 = vmor %vm1511, %vm1512
      %v1514 = vsel %vm1513, %v1505, %v1510
      %v1515 = vrsqrt.pop %v1482
      %v1516 = vmul.f32 %v1515, %v1482
      %v1517 = vmul.f32 %v1516, %v1515
      %v1518 = vmul.f32 0.5, %v1517
      %v1519 = vsub.f32 1.5, %v1518
      %v1520 = vmul.f32 %v1515, %v1519
      %vm1521 = vweird.f32 %v1482
      %vm1522 = vweird.f32 %v1515
      %vm1523 = vmor %vm1521, %vm1522
      %v1524 = vsel %vm1523, %v1515, %v1520
      %v1525 = vrsqrt.pop %v1483
      %v1526 = vmul.f32 %v1525, %v1483
      %v1527 = vmul.f32 %v1526, %v1525
      %v1528 = vmul.f32 0.5, %v1527
      %v1529 = vsub.f32 1.5, %v1528
      %v1530 = vmul.f32 %v1525, %v1529
      %vm1531 = vweird.f32 %v1483
      %vm1532 = vweird.f32 %v1525
      %vm1533 = vmor %vm1531, %vm1532
      %v1534 = vsel %vm1533, %v1525, %v1530
      %v1535 = vrsqrt.pop %v1484
      %v1536 = vmul.f32 %v1535, %v1484
      %v1537 = vmul.f32 %v1536, %v1535
      %v1538 = vmul.f32 0.5, %v1537
      %v1539 = vsub.f32 1.5, %v1538
      %v1540 = vmul.f32 %v1535, %v1539
      %vm1541 = vweird.f32 %v1484
      %vm1542 = vweird.f32 %v1535
      %vm1543 = vmor %vm1541, %vm1542
      %v1544 = vsel %vm1543, %v1535, %v1540
      %v1545 = vmul.f32 %v1473, %v1494
      %v1546 = vmul.f32 %v1474, %v1504
      %v1547 = vmul.f32 %v1475, %v1514
      %v1548 = vmul.f32 %v1476, %v1524
      %v1549 = vmul.f32 %v1477, %v1534
      %v1550 = vmul.f32 %v1478, %v1544
      %v1551 = vperm.slane %v397, 1
      %v1552 = vmul.f32 %v1545, %v1551
      %v1553 = vmul.f32 %v1546, %v1551
      %v1554 = vmul.f32 %v1547, %v1551
      %v1555 = vmul.f32 %v1548, %v1551
      %v1556 = vmul.f32 %v1549, %v1551
      %v1557 = vmul.f32 %v1550, %v1551
      %v1558 = vperm.slane %v397, 2
      %v1559 = vadd.f32 %v1552, %v1558
      %v1560 = vadd.f32 %v1553, %v1558
      %v1561 = vadd.f32 %v1554, %v1558
      %v1562 = vadd.f32 %v1555, %v1558
      %v1563 = vadd.f32 %v1556, %v1558
      %v1564 = vadd.f32 %v1557, %v1558
      %v1565 = vmax.f32 %v1559, 0.0
      %v1566 = vmax.f32 %v1560, 0.0
      %v1567 = vmax.f32 %v1561, 0.0
      %v1568 = vmax.f32 %v1562, 0.0
      %v1569 = vmax.f32 %v1563, 0.0
      %v1570 = vmax.f32 %v1564, 0.0
      %v1571 = vpack.c.bf16 %v1566, %v1565
      %v1572 = vpack.c.bf16 %v1568, %v1567
      %v1573 = vpack.c.bf16 %v1570, %v1569
      %v1574 = vld [vmem:[%s8] sm:$0xf]
      %v1575 = vld [vmem:[%s8 + $0x4] sm:$0xf]
      %v1576 = vld [vmem:[%s8 + $0x8] sm:$0xf]
      %v1577 = vld [vmem:[%s8 + $0xc] sm:$0xf]
      %v1578 = vld [vmem:[%s8 + $0x10] sm:$0xf]
      %v1579 = vld [vmem:[%s8 + $0x14] sm:$0xf]
      %v1580 = vld [vmem:[%s8 + $0x18] sm:$0xf]
      %v1581 = vld [vmem:[%s8 + $0x1c] sm:$0xf]
      %v1582 = vperm.slane %v398, 0
      %v1591 = vunpack.c.l.b16 %v1574
      %v1592 = vunpack.c.l.b16 %v1575
      %v1593 = vunpack.c.l.b16 %v1576
      %v1594 = vunpack.c.l.b16 %v1577
      %v1595 = vunpack.c.l.b16 %v1578
      %v1596 = vunpack.c.l.b16 %v1579
      %v1597 = vunpack.c.l.b16 %v1580
      %v1598 = vunpack.c.l.b16 %v1581
      %v1599 = vpack.c.b16 %v1592, %v1591
      %v1600 = vpack.c.b16 %v1594, %v1593
      %v1601 = vpack.c.b16 %v1596, %v1595
      %v1602 = vpack.c.b16 %v1598, %v1597
      %v1608 = vsel %vm1393, %v1571, 0
      %v1611 = vsel %vm1393, %v1572, 0
      %v1614 = vsel %vm1393, %v1573, 0
      %1616 = vmatpush.bf16.msra.mxu0 0
      %1617 = vmatpush.bf16.msra.mxu0 0
      %1618 = vmatpush.bf16.msra.mxu0 0
      %1619 = vmatpush.bf16.msra.mxu0 0
      %1620 = vmatpush.bf16.msra.mxu0 %v1602
      %1621 = vmatpush.bf16.msra.mxu0 %v1601
      %1622 = vmatpush.bf16.msra.mxu0 %v1600
      %1623 = vmatpush.bf16.msra.mxu0 %v1599
      %1624 = vmatmul.bf16.gmra.mxu0 %v1608
      %v1625 = vpop.f32.mrf.mxu0
      %v1626 = vadd.f32 %v1582, %v1625
      %v1627 = vpop.f32.mrf.mxu0
      %v1628 = vadd.f32 %v1582, %v1627
      %1629 = vmatmul.bf16.gmra.mxu0 %v1611
      %v1630 = vpop.f32.mrf.mxu0
      %v1631 = vadd.f32 %v1582, %v1630
      %v1632 = vpop.f32.mrf.mxu0
      %v1633 = vadd.f32 %v1582, %v1632
      %1634 = vmatmul.bf16.gmra.mxu0 %v1614
      %v1635 = vpop.f32.mrf.mxu0
      %v1636 = vadd.f32 %v1582, %v1635
      %v1637 = vpop.f32.mrf.mxu0
      %v1638 = vadd.f32 %v1582, %v1637
      %1639 = vdwg.mxu0
      %vm1640 = vcmask 392192
      %v1641 = vsel %vm1640, %v1626, 0.0
      %1642 = vadd.xlane.f32.xlu0 %v1641
      %v1643 = vpop.xlane.xlu0 %1642
      %v1644 = vsel %vm1640, %v1628, 0.0
      %1645 = vadd.xlane.f32.xlu0 %v1644
      %v1646 = vpop.xlane.xlu0 %1645
      %v1647 = vsel %vm1640, %v1631, 0.0
      %1648 = vadd.xlane.f32.xlu0 %v1647
      %v1649 = vpop.xlane.xlu0 %1648
      %v1650 = vsel %vm1640, %v1633, 0.0
      %1651 = vadd.xlane.f32.xlu0 %v1650
      %v1652 = vpop.xlane.xlu0 %1651
      %v1653 = vsel %vm1640, %v1636, 0.0
      %1654 = vadd.xlane.f32.xlu0 %v1653
      %v1655 = vpop.xlane.xlu0 %1654
      %v1656 = vsel %vm1640, %v1638, 0.0
      %1657 = vadd.xlane.f32.xlu0 %v1656
      %v1658 = vpop.xlane.xlu0 %1657
      %v1659 = vrcp.pop 48.0
      %v1660 = vmul.f32 48.0, %v1659
      %v1661 = vsub.f32 1.0, %v1660
      %v1662 = vmul.f32 %v1659, %v1661
      %v1663 = vadd.f32 %v1659, %v1662
      %vm1664 = vweird.f32 %v1659
      %v1665 = vsel %vm1664, %v1659, %v1663
      %v1666 = vmul.f32 %v1643, %v1665
      %v1667 = vmul.f32 %v1646, %v1665
      %v1668 = vmul.f32 %v1649, %v1665
      %v1669 = vmul.f32 %v1652, %v1665
      %v1670 = vmul.f32 %v1655, %v1665
      %v1671 = vmul.f32 %v1658, %v1665
      %v1672 = vmul.f32 %v1626, %v1626
      %v1673 = vmul.f32 %v1628, %v1628
      %v1674 = vmul.f32 %v1631, %v1631
      %v1675 = vmul.f32 %v1633, %v1633
      %v1676 = vmul.f32 %v1636, %v1636
      %v1677 = vmul.f32 %v1638, %v1638
      %v1678 = vsel %vm1640, %v1672, 0.0
      %1679 = vadd.xlane.f32.xlu0 %v1678
      %v1680 = vpop.xlane.xlu0 %1679
      %v1681 = vsel %vm1640, %v1673, 0.0
      %1682 = vadd.xlane.f32.xlu0 %v1681
      %v1683 = vpop.xlane.xlu0 %1682
      %v1684 = vsel %vm1640, %v1674, 0.0
      %1685 = vadd.xlane.f32.xlu0 %v1684
      %v1686 = vpop.xlane.xlu0 %1685
      %v1687 = vsel %vm1640, %v1675, 0.0
      %1688 = vadd.xlane.f32.xlu0 %v1687
      %v1689 = vpop.xlane.xlu0 %1688
      %v1690 = vsel %vm1640, %v1676, 0.0
      %1691 = vadd.xlane.f32.xlu0 %v1690
      %v1692 = vpop.xlane.xlu0 %1691
      %v1693 = vsel %vm1640, %v1677, 0.0
      %1694 = vadd.xlane.f32.xlu0 %v1693
      %v1695 = vpop.xlane.xlu0 %1694
      %v1696 = vmul.f32 %v1680, %v1665
      %v1697 = vmul.f32 %v1683, %v1665
      %v1698 = vmul.f32 %v1686, %v1665
      %v1699 = vmul.f32 %v1689, %v1665
      %v1700 = vmul.f32 %v1692, %v1665
      %v1701 = vmul.f32 %v1695, %v1665
      %v1702 = vmul.f32 %v1666, %v1666
      %v1703 = vmul.f32 %v1667, %v1667
      %v1704 = vmul.f32 %v1668, %v1668
      %v1705 = vmul.f32 %v1669, %v1669
      %v1706 = vmul.f32 %v1670, %v1670
      %v1707 = vmul.f32 %v1671, %v1671
      %v1708 = vsub.f32 %v1696, %v1702
      %v1709 = vsub.f32 %v1697, %v1703
      %v1710 = vsub.f32 %v1698, %v1704
      %v1711 = vsub.f32 %v1699, %v1705
      %v1712 = vsub.f32 %v1700, %v1706
      %v1713 = vsub.f32 %v1701, %v1707
      %v1714 = vmax.f32 %v1708, 0.0
      %v1715 = vmax.f32 %v1709, 0.0
      %v1716 = vmax.f32 %v1710, 0.0
      %v1717 = vmax.f32 %v1711, 0.0
      %v1718 = vmax.f32 %v1712, 0.0
      %v1719 = vmax.f32 %v1713, 0.0
      %v1720 = vsub.f32 %v1626, %v1666
      %v1721 = vsub.f32 %v1628, %v1667
      %v1722 = vsub.f32 %v1631, %v1668
      %v1723 = vsub.f32 %v1633, %v1669
      %v1724 = vsub.f32 %v1636, %v1670
      %v1725 = vsub.f32 %v1638, %v1671
      %v1726 = vadd.f32 %v1714, 1e-05
      %v1727 = vadd.f32 %v1715, 1e-05
      %v1728 = vadd.f32 %v1716, 1e-05
      %v1729 = vadd.f32 %v1717, 1e-05
      %v1730 = vadd.f32 %v1718, 1e-05
      %v1731 = vadd.f32 %v1719, 1e-05
      %v1732 = vrsqrt.pop %v1726
      %v1733 = vmul.f32 %v1732, %v1726
      %v1734 = vmul.f32 %v1733, %v1732
      %v1735 = vmul.f32 0.5, %v1734
      %v1736 = vsub.f32 1.5, %v1735
      %v1737 = vmul.f32 %v1732, %v1736
      %vm1738 = vweird.f32 %v1726
      %vm1739 = vweird.f32 %v1732
      %vm1740 = vmor %vm1738, %vm1739
      %v1741 = vsel %vm1740, %v1732, %v1737
      %v1742 = vrsqrt.pop %v1727
      %v1743 = vmul.f32 %v1742, %v1727
      %v1744 = vmul.f32 %v1743, %v1742
      %v1745 = vmul.f32 0.5, %v1744
      %v1746 = vsub.f32 1.5, %v1745
      %v1747 = vmul.f32 %v1742, %v1746
      %vm1748 = vweird.f32 %v1727
      %vm1749 = vweird.f32 %v1742
      %vm1750 = vmor %vm1748, %vm1749
      %v1751 = vsel %vm1750, %v1742, %v1747
      %v1752 = vrsqrt.pop %v1728
      %v1753 = vmul.f32 %v1752, %v1728
      %v1754 = vmul.f32 %v1753, %v1752
      %v1755 = vmul.f32 0.5, %v1754
      %v1756 = vsub.f32 1.5, %v1755
      %v1757 = vmul.f32 %v1752, %v1756
      %vm1758 = vweird.f32 %v1728
      %vm1759 = vweird.f32 %v1752
      %vm1760 = vmor %vm1758, %vm1759
      %v1761 = vsel %vm1760, %v1752, %v1757
      %v1762 = vrsqrt.pop %v1729
      %v1763 = vmul.f32 %v1762, %v1729
      %v1764 = vmul.f32 %v1763, %v1762
      %v1765 = vmul.f32 0.5, %v1764
      %v1766 = vsub.f32 1.5, %v1765
      %v1767 = vmul.f32 %v1762, %v1766
      %vm1768 = vweird.f32 %v1729
      %vm1769 = vweird.f32 %v1762
      %vm1770 = vmor %vm1768, %vm1769
      %v1771 = vsel %vm1770, %v1762, %v1767
      %v1772 = vrsqrt.pop %v1730
      %v1773 = vmul.f32 %v1772, %v1730
      %v1774 = vmul.f32 %v1773, %v1772
      %v1775 = vmul.f32 0.5, %v1774
      %v1776 = vsub.f32 1.5, %v1775
      %v1777 = vmul.f32 %v1772, %v1776
      %vm1778 = vweird.f32 %v1730
      %vm1779 = vweird.f32 %v1772
      %vm1780 = vmor %vm1778, %vm1779
      %v1781 = vsel %vm1780, %v1772, %v1777
      %v1782 = vrsqrt.pop %v1731
      %v1783 = vmul.f32 %v1782, %v1731
      %v1784 = vmul.f32 %v1783, %v1782
      %v1785 = vmul.f32 0.5, %v1784
      %v1786 = vsub.f32 1.5, %v1785
      %v1787 = vmul.f32 %v1782, %v1786
      %vm1788 = vweird.f32 %v1731
      %vm1789 = vweird.f32 %v1782
      %vm1790 = vmor %vm1788, %vm1789
      %v1791 = vsel %vm1790, %v1782, %v1787
      %v1792 = vmul.f32 %v1720, %v1741
      %v1793 = vmul.f32 %v1721, %v1751
      %v1794 = vmul.f32 %v1722, %v1761
      %v1795 = vmul.f32 %v1723, %v1771
      %v1796 = vmul.f32 %v1724, %v1781
      %v1797 = vmul.f32 %v1725, %v1791
      %v1798 = vperm.slane %v398, 1
      %v1799 = vmul.f32 %v1792, %v1798
      %v1800 = vmul.f32 %v1793, %v1798
      %v1801 = vmul.f32 %v1794, %v1798
      %v1802 = vmul.f32 %v1795, %v1798
      %v1803 = vmul.f32 %v1796, %v1798
      %v1804 = vmul.f32 %v1797, %v1798
      %v1805 = vperm.slane %v398, 2
      %v1806 = vadd.f32 %v1799, %v1805
      %v1807 = vadd.f32 %v1800, %v1805
      %v1808 = vadd.f32 %v1801, %v1805
      %v1809 = vadd.f32 %v1802, %v1805
      %v1810 = vadd.f32 %v1803, %v1805
      %v1811 = vadd.f32 %v1804, %v1805
      %v1812 = vmax.f32 %v1806, 0.0
      %v1813 = vmax.f32 %v1807, 0.0
      %v1814 = vmax.f32 %v1808, 0.0
      %v1815 = vmax.f32 %v1809, 0.0
      %v1816 = vmax.f32 %v1810, 0.0
      %v1817 = vmax.f32 %v1811, 0.0
      %v1818 = vpack.c.bf16 %v1813, %v1812
      %v1819 = vpack.c.bf16 %v1815, %v1814
      %v1820 = vpack.c.bf16 %v1817, %v1816
      %v1821 = vld [vmem:[%s10] sm:$0xf]
      %v1822 = vld [vmem:[%s10 + $0x4] sm:$0xf]
      %v1823 = vld [vmem:[%s10 + $0x8] sm:$0xf]
      %v1824 = vld [vmem:[%s10 + $0xc] sm:$0xf]
      %v1825 = vld [vmem:[%s10 + $0x10] sm:$0xf]
      %v1826 = vld [vmem:[%s10 + $0x14] sm:$0xf]
      %v1827 = vperm.slane %v396, 2
      %v1834 = vunpack.c.l.b16 %v1821
      %v1835 = vunpack.c.l.b16 %v1822
      %v1836 = vunpack.c.l.b16 %v1823
      %v1837 = vunpack.c.l.b16 %v1824
      %v1838 = vunpack.c.l.b16 %v1825
      %v1839 = vunpack.c.l.b16 %v1826
      %v1840 = vpack.c.b16 %v1835, %v1834
      %v1841 = vpack.c.b16 %v1837, %v1836
      %v1842 = vpack.c.b16 %v1839, %v1838
      %v1847 = vsel %vm1640, %v1818, 0
      %v1850 = vsel %vm1640, %v1819, 0
      %v1853 = vsel %vm1640, %v1820, 0
      %1855 = vmatpush.bf16.msra.mxu0 0
      %1856 = vmatpush.bf16.msra.mxu0 0
      %1857 = vmatpush.bf16.msra.mxu0 0
      %1858 = vmatpush.bf16.msra.mxu0 0
      %1859 = vmatpush.bf16.msra.mxu0 0
      %1860 = vmatpush.bf16.msra.mxu0 %v1842
      %1861 = vmatpush.bf16.msra.mxu0 %v1841
      %1862 = vmatpush.bf16.msra.mxu0 %v1840
      %1863 = vmatmul.bf16.gmra.mxu0 %v1847
      %v1864 = vpop.f32.mrf.mxu0
      %v1865 = vadd.f32 %v1827, %v1864
      %v1866 = vpop.f32.mrf.mxu0
      %v1867 = vadd.f32 %v1827, %v1866
      %1868 = vmatmul.bf16.gmra.mxu0 %v1850
      %v1869 = vpop.f32.mrf.mxu0
      %v1870 = vadd.f32 %v1827, %v1869
      %v1871 = vpop.f32.mrf.mxu0
      %v1872 = vadd.f32 %v1827, %v1871
      %1873 = vmatmul.bf16.gmra.mxu0 %v1853
      %v1874 = vpop.f32.mrf.mxu0
      %v1875 = vadd.f32 %v1827, %v1874
      %v1876 = vpop.f32.mrf.mxu0
      %v1877 = vadd.f32 %v1827, %v1876
      %1878 = vdwg.mxu0
      %v1879 = vadd.f32 %v1334, %v1865
      %v1880 = vadd.f32 %v1335, %v1867
      %v1881 = vadd.f32 %v1336, %v1870
      %v1882 = vadd.f32 %v1337, %v1872
      %v1883 = vadd.f32 %v1338, %v1875
      %v1884 = vadd.f32 %v1339, %v1877
      %v1885 = vsel %vm477, %v1879, 0.0
      %1886 = vadd.xlane.f32.xlu0 %v1885
      %v1887 = vpop.xlane.xlu0 %1886
      %v1888 = vsel %vm477, %v1880, 0.0
      %1889 = vadd.xlane.f32.xlu0 %v1888
      %v1890 = vpop.xlane.xlu0 %1889
      %v1891 = vsel %vm477, %v1881, 0.0
      %1892 = vadd.xlane.f32.xlu0 %v1891
      %v1893 = vpop.xlane.xlu0 %1892
      %v1894 = vsel %vm477, %v1882, 0.0
      %1895 = vadd.xlane.f32.xlu0 %v1894
      %v1896 = vpop.xlane.xlu0 %1895
      %v1897 = vsel %vm477, %v1883, 0.0
      %1898 = vadd.xlane.f32.xlu0 %v1897
      %v1899 = vpop.xlane.xlu0 %1898
      %v1900 = vsel %vm477, %v1884, 0.0
      %1901 = vadd.xlane.f32.xlu0 %v1900
      %v1902 = vpop.xlane.xlu0 %1901
      %v1903 = vmul.f32 %v1887, %v1193
      %v1904 = vmul.f32 %v1890, %v1193
      %v1905 = vmul.f32 %v1893, %v1193
      %v1906 = vmul.f32 %v1896, %v1193
      %v1907 = vmul.f32 %v1899, %v1193
      %v1908 = vmul.f32 %v1902, %v1193
      %v1909 = vmul.f32 %v1879, %v1879
      %v1910 = vmul.f32 %v1880, %v1880
      %v1911 = vmul.f32 %v1881, %v1881
      %v1912 = vmul.f32 %v1882, %v1882
      %v1913 = vmul.f32 %v1883, %v1883
      %v1914 = vmul.f32 %v1884, %v1884
      %v1915 = vsel %vm477, %v1909, 0.0
      %1916 = vadd.xlane.f32.xlu0 %v1915
      %v1917 = vpop.xlane.xlu0 %1916
      %v1918 = vsel %vm477, %v1910, 0.0
      %1919 = vadd.xlane.f32.xlu0 %v1918
      %v1920 = vpop.xlane.xlu0 %1919
      %v1921 = vsel %vm477, %v1911, 0.0
      %1922 = vadd.xlane.f32.xlu0 %v1921
      %v1923 = vpop.xlane.xlu0 %1922
      %v1924 = vsel %vm477, %v1912, 0.0
      %1925 = vadd.xlane.f32.xlu0 %v1924
      %v1926 = vpop.xlane.xlu0 %1925
      %v1927 = vsel %vm477, %v1913, 0.0
      %1928 = vadd.xlane.f32.xlu0 %v1927
      %v1929 = vpop.xlane.xlu0 %1928
      %v1930 = vsel %vm477, %v1914, 0.0
      %1931 = vadd.xlane.f32.xlu0 %v1930
      %v1932 = vpop.xlane.xlu0 %1931
      %v1933 = vmul.f32 %v1917, %v1193
      %v1934 = vmul.f32 %v1920, %v1193
      %v1935 = vmul.f32 %v1923, %v1193
      %v1936 = vmul.f32 %v1926, %v1193
      %v1937 = vmul.f32 %v1929, %v1193
      %v1938 = vmul.f32 %v1932, %v1193
      %v1939 = vmul.f32 %v1903, %v1903
      %v1940 = vmul.f32 %v1904, %v1904
      %v1941 = vmul.f32 %v1905, %v1905
      %v1942 = vmul.f32 %v1906, %v1906
      %v1943 = vmul.f32 %v1907, %v1907
      %v1944 = vmul.f32 %v1908, %v1908
      %v1945 = vsub.f32 %v1933, %v1939
      %v1946 = vsub.f32 %v1934, %v1940
      %v1947 = vsub.f32 %v1935, %v1941
      %v1948 = vsub.f32 %v1936, %v1942
      %v1949 = vsub.f32 %v1937, %v1943
      %v1950 = vsub.f32 %v1938, %v1944
      %v1951 = vmax.f32 %v1945, 0.0
      %v1952 = vmax.f32 %v1946, 0.0
      %v1953 = vmax.f32 %v1947, 0.0
      %v1954 = vmax.f32 %v1948, 0.0
      %v1955 = vmax.f32 %v1949, 0.0
      %v1956 = vmax.f32 %v1950, 0.0
      %v1957 = vsub.f32 %v1879, %v1903
      %v1958 = vsub.f32 %v1880, %v1904
      %v1959 = vsub.f32 %v1881, %v1905
      %v1960 = vsub.f32 %v1882, %v1906
      %v1961 = vsub.f32 %v1883, %v1907
      %v1962 = vsub.f32 %v1884, %v1908
      %v1963 = vadd.f32 %v1951, 1e-05
      %v1964 = vadd.f32 %v1952, 1e-05
      %v1965 = vadd.f32 %v1953, 1e-05
      %v1966 = vadd.f32 %v1954, 1e-05
      %v1967 = vadd.f32 %v1955, 1e-05
      %v1968 = vadd.f32 %v1956, 1e-05
      %v1969 = vrsqrt.pop %v1963
      %v1970 = vmul.f32 %v1969, %v1963
      %v1971 = vmul.f32 %v1970, %v1969
      %v1972 = vmul.f32 0.5, %v1971
      %v1973 = vsub.f32 1.5, %v1972
      %v1974 = vmul.f32 %v1969, %v1973
      %vm1975 = vweird.f32 %v1963
      %vm1976 = vweird.f32 %v1969
      %vm1977 = vmor %vm1975, %vm1976
      %v1978 = vsel %vm1977, %v1969, %v1974
      %v1979 = vrsqrt.pop %v1964
      %v1980 = vmul.f32 %v1979, %v1964
      %v1981 = vmul.f32 %v1980, %v1979
      %v1982 = vmul.f32 0.5, %v1981
      %v1983 = vsub.f32 1.5, %v1982
      %v1984 = vmul.f32 %v1979, %v1983
      %vm1985 = vweird.f32 %v1964
      %vm1986 = vweird.f32 %v1979
      %vm1987 = vmor %vm1985, %vm1986
      %v1988 = vsel %vm1987, %v1979, %v1984
      %v1989 = vrsqrt.pop %v1965
      %v1990 = vmul.f32 %v1989, %v1965
      %v1991 = vmul.f32 %v1990, %v1989
      %v1992 = vmul.f32 0.5, %v1991
      %v1993 = vsub.f32 1.5, %v1992
      %v1994 = vmul.f32 %v1989, %v1993
      %vm1995 = vweird.f32 %v1965
      %vm1996 = vweird.f32 %v1989
      %vm1997 = vmor %vm1995, %vm1996
      %v1998 = vsel %vm1997, %v1989, %v1994
      %v1999 = vrsqrt.pop %v1966
      %v2000 = vmul.f32 %v1999, %v1966
      %v2001 = vmul.f32 %v2000, %v1999
      %v2002 = vmul.f32 0.5, %v2001
      %v2003 = vsub.f32 1.5, %v2002
      %v2004 = vmul.f32 %v1999, %v2003
      %vm2005 = vweird.f32 %v1966
      %vm2006 = vweird.f32 %v1999
      %vm2007 = vmor %vm2005, %vm2006
      %v2008 = vsel %vm2007, %v1999, %v2004
      %v2009 = vrsqrt.pop %v1967
      %v2010 = vmul.f32 %v2009, %v1967
      %v2011 = vmul.f32 %v2010, %v2009
      %v2012 = vmul.f32 0.5, %v2011
      %v2013 = vsub.f32 1.5, %v2012
      %v2014 = vmul.f32 %v2009, %v2013
      %vm2015 = vweird.f32 %v1967
      %vm2016 = vweird.f32 %v2009
      %vm2017 = vmor %vm2015, %vm2016
      %v2018 = vsel %vm2017, %v2009, %v2014
      %v2019 = vrsqrt.pop %v1968
      %v2020 = vmul.f32 %v2019, %v1968
      %v2021 = vmul.f32 %v2020, %v2019
      %v2022 = vmul.f32 0.5, %v2021
      %v2023 = vsub.f32 1.5, %v2022
      %v2024 = vmul.f32 %v2019, %v2023
      %vm2025 = vweird.f32 %v1968
      %vm2026 = vweird.f32 %v2019
      %vm2027 = vmor %vm2025, %vm2026
      %v2028 = vsel %vm2027, %v2019, %v2024
      %v2029 = vmul.f32 %v1957, %v1978
      %v2030 = vmul.f32 %v1958, %v1988
      %v2031 = vmul.f32 %v1959, %v1998
      %v2032 = vmul.f32 %v1960, %v2008
      %v2033 = vmul.f32 %v1961, %v2018
      %v2034 = vmul.f32 %v1962, %v2028
      %v2035 = vperm.slane %v396, 3
      %v2036 = vmul.f32 %v2029, %v2035
      %v2037 = vmul.f32 %v2030, %v2035
      %v2038 = vmul.f32 %v2031, %v2035
      %v2039 = vmul.f32 %v2032, %v2035
      %v2040 = vmul.f32 %v2033, %v2035
      %v2041 = vmul.f32 %v2034, %v2035
      %v2042 = vperm.slane %v396, 4
      %v2043 = vadd.f32 %v2036, %v2042
      %v2044 = vadd.f32 %v2037, %v2042
      %v2045 = vadd.f32 %v2038, %v2042
      %v2046 = vadd.f32 %v2039, %v2042
      %v2047 = vadd.f32 %v2040, %v2042
      %v2048 = vadd.f32 %v2041, %v2042
      %2049 = vst.msk [vmem:[%s393] sm:$0xff] %vm477, %v2043
      %2050 = vst.msk [vmem:[%s393 + $0x8] sm:$0xff] %vm477, %v2044
      %2051 = vst.msk [vmem:[%s393 + $0x10] sm:$0xff] %vm477, %v2045
      %2052 = vst.msk [vmem:[%s393 + $0x18] sm:$0xff] %vm477, %v2046
      %2053 = vst.msk [vmem:[%s393 + $0x20] sm:$0xff] %vm477, %v2047
      %2054 = vst.msk [vmem:[%s393 + $0x28] sm:$0xff] %vm477, %v2048
      %s2055 = smul.u32 2, %s22
      %p2056 = scmp.lt.s32.totalorder %s2055, 3
      %s2057 = scalar_select %p2056, %s2055, 3
      %s2058 = smul.addr %s2057, 3
      %s2059 = smul.addr %s2058, 8
      %s2060 = scalar_lea.vmem %s11, %s2059
      // Predicated region
      $region65: #{transformer_encoder.1} parent=63 // pred_check
        %p2061 = pneg %p276
      $region66: #{transformer_encoder.1} parent=63 // pred_check_branch
        %2063 = sbr.rel (%p2061) target = $region68
      $region67: #{transformer_encoder.1} parent=63 // pred_region
        %s2064 = smul.u32 2, %s22
      $region68: #{transformer_encoder.1} parent=63 // pred_fallthru
        _
    $region64: #{transformer_encoder.1} parent=5 // pred_fallthru
      _
    %p2065 = scmp.le.s32.totalorder 2, %s17
    // Predicated region
    $region69: #{transformer_encoder.1} parent=5 // pred_check
      %p2066 = pneg %p2065
    $region70: #{transformer_encoder.1} parent=5 // pred_check_branch
      %2068 = sbr.rel (%p2066) target = $region72
    $region71: #{transformer_encoder.1} parent=5 // pred_region
      %s2069 = ssub.s32 %s17, 2
      // Predicated region
      $region73: #{transformer_encoder.1} parent=71 // pred_check
        %p2070 = pneg %p282
      $region74: #{transformer_encoder.1} parent=71 // pred_check_branch
        %2072 = sbr.rel (%p2070) target = $region76
      $region75: #{transformer_encoder.1} parent=71 // pred_region
        %s2073 = smul.u32 2, %s23
        %p2074 = scmp.lt.s32.totalorder %s2073, 3
        %s2075 = scalar_select %p2074, %s2073, 3
        %s2076 = smul.addr %s2075, 3
        %s2077 = smul.addr %s2076, 8
        %s2078 = scalar_lea.vmem %s11, %s2077
      $region76: #{transformer_encoder.1} parent=71 // pred_fallthru
        _
    $region72: #{transformer_encoder.1} parent=5 // pred_fallthru
      _
  $region6: #{transformer_encoder.1} parent=0 // loop_footer
    %s21 = sadd.s32 1, %s17
  $region7: #{transformer_encoder.1} parent=0 // loop_footer_branch
    %16 = sbr.rel target = $region3
  $region8: #{transformer_encoder.1} parent=0 // loop_exit
    _

</llo_original>
